<compile_context>
chip_gen: v6e
topology: v6e:2x2x1
jax: 0.10.0
libtpu: 0.0.40
codegen_flags: <defaults>
</compile_context>

<pallas_src>
import jax
import jax.numpy as jnp
from jax.experimental import pallas as pl
from jax.experimental.pallas import tpu as pltpu

NUM_CLASSES = 10
LANES = 128  # pad output-channel dims to this for lane-dense stores


def _round_up(x, m):
    return (x + m - 1) // m * m


# ----------------------------- Pallas kernels ------------------------------

def conv_relu_pool_kernel(p_ref, w_ref, b_ref, o_ref):
    # p_ref: (1, 4*TM, K)  im2col patches, 4 pool phases stacked along rows
    # w_ref: (K, 128)      conv weights (Cout zero-padded to 128 lanes)
    # b_ref: (1, 128)      conv bias    (zero-padded to 128 lanes)
    # o_ref: (TM, 128)     relu(maxpool(conv)) output rows (lane-dense)
    tm = o_ref.shape[0]
    # single MXU push: M = 4*TM rows, default (single-pass) precision
    y = jnp.dot(p_ref[0], w_ref[...], preferred_element_type=jnp.float32)
    # max over the 4 pooling phases: aligned static row-slices (TM % 8 == 0)
    m = jnp.maximum(jnp.maximum(y[0:tm], y[tm:2 * tm]),
                    jnp.maximum(y[2 * tm:3 * tm], y[3 * tm:4 * tm]))
    # relu(maxpool(conv+b)) == maxpool(relu(conv+b)); bias is phase-invariant
    o_ref[...] = jnp.maximum(m + b_ref[...], 0.0).astype(o_ref.dtype)


def fc_kernel(x_ref, w_ref, b_ref, o_ref):
    # x_ref: (B, D), w_ref: (D, 128), b_ref: (1, 128), o_ref: (B, 128)
    o_ref[...] = (jnp.dot(x_ref[...], w_ref[...],
                          preferred_element_type=jnp.float32)
                  + b_ref[...]).astype(o_ref.dtype)


# ------------------------------- JAX glue -----------------------------------

def im2col_pool_phases(x_nhwc):
    """(B,H,W,Cin) -> (4, B*(H/2)*(W/2), 9*Cin) patches for a 3x3 conv,
    padding=1, grouped by the four 2x2-maxpool phases."""
    B, H, W, Cin = x_nhwc.shape
    xp = jnp.pad(x_nhwc, ((0, 0), (1, 1), (1, 1), (0, 0)))
    cols = [xp[:, kh:kh + H, kw:kw + W, :] for kh in range(3) for kw in range(3)]
    patches = jnp.stack(cols, axis=3).reshape(B, H, W, 9 * Cin)  # (kh,kw,cin)
    phases = jnp.stack([patches[:, 0::2, 0::2],
                        patches[:, 0::2, 1::2],
                        patches[:, 1::2, 0::2],
                        patches[:, 1::2, 1::2]], axis=0)          # (4,B,Ho,Wo,K)
    return phases.reshape(4, B * (H // 2) * (W // 2), 9 * Cin)


def conv_relu_pool(x_nhwc, conv_w, conv_b, *, tile_m=512):
    """3x3 conv (stride 1, pad 1) + ReLU + 2x2 maxpool via one Pallas kernel."""
    B, H, W, Cin = x_nhwc.shape
    Cout = conv_w.shape[0]
    Ho, Wo = H // 2, W // 2
    K = 9 * Cin
    M = B * Ho * Wo

    phases = im2col_pool_phases(x_nhwc)                    # (4, M, K)

    # Tile the (batch*spatial) M dimension; TM must be a multiple of 8.
    TM = min(_round_up(M, 8), tile_m)
    Mp = _round_up(M, TM)
    if Mp != M:
        phases = jnp.pad(phases, ((0, 0), (0, Mp - M), (0, 0)))
    n_tiles = Mp // TM
    # Per M-tile, stack the 4 phases contiguously along rows -> one big dot.
    lhs = (phases.reshape(4, n_tiles, TM, K)
           .transpose(1, 0, 2, 3)
           .reshape(n_tiles, 4 * TM, K))

    # PyTorch conv weight is (Cout, Cin, kh, kw); match (kh,kw,cin) order and
    # zero-pad Cout to 128 so the kernel's stores are lane-dense.
    w_mat = jnp.transpose(conv_w, (2, 3, 1, 0)).reshape(K, Cout)
    w_mat = jnp.pad(w_mat, ((0, 0), (0, LANES - Cout)))
    b_mat = jnp.pad(conv_b.reshape(1, Cout), ((0, 0), (0, LANES - Cout)))

    out = pl.pallas_call(
        conv_relu_pool_kernel,
        out_shape=jax.ShapeDtypeStruct((Mp, LANES), jnp.float32),
        grid=(n_tiles,),
        in_specs=[
            pl.BlockSpec((1, 4 * TM, K), lambda i: (i, 0, 0)),
            pl.BlockSpec((K, LANES), lambda i: (0, 0)),
            pl.BlockSpec((1, LANES), lambda i: (0, 0)),
        ],
        out_specs=pl.BlockSpec((TM, LANES), lambda i: (i, 0)),
        compiler_params=pltpu.CompilerParams(
            dimension_semantics=("parallel",)),
    )(lhs, w_mat, b_mat)

    return out[:M, :Cout].reshape(B, Ho, Wo, Cout)          # NHWC


def linear(x, w_t_padded, b_padded, num_out):
    """x @ W + b with lane-padded (D,128) weights; Pallas kernel, grid=(1,)."""
    B, D = x.shape
    out = pl.pallas_call(
        fc_kernel,
        out_shape=jax.ShapeDtypeStruct((B, LANES), jnp.float32),
        grid=(1,),
        in_specs=[
            pl.BlockSpec((B, D), lambda i: (0, 0)),
            pl.BlockSpec((D, LANES), lambda i: (0, 0)),
            pl.BlockSpec((1, LANES), lambda i: (0, 0)),
        ],
        out_specs=pl.BlockSpec((B, LANES), lambda i: (0, 0)),
    )(x, w_t_padded, b_padded)
    return out[:, :num_out]


@jax.jit
def cnn_forward(x_nchw, conv1_w, conv1_b, conv2_w, conv2_b, fc_w, fc_b):
    x = jnp.transpose(x_nchw, (0, 2, 3, 1))                 # NCHW -> NHWC
    x = conv_relu_pool(x, conv1_w, conv1_b)                 # (B, 14, 14, 8)
    x = conv_relu_pool(x, conv2_w, conv2_b)                 # (B, 7, 7, 16)
    B, Ho, Wo, C2 = x.shape
    x_flat = x.reshape(B, Ho * Wo * C2)                     # NHWC flatten (no transpose)

    # Permute fc1's columns from NCHW-flatten order to NHWC-flatten order so
    # the activation transpose is eliminated (permutation is on the weight).
    C = fc_w.shape[0]
    w_perm = (fc_w.reshape(C, C2, Ho, Wo)
              .transpose(0, 2, 3, 1)
              .reshape(C, Ho * Wo * C2))
    w_t = jnp.pad(w_perm.T, ((0, 0), (0, LANES - C)))       # (D, 128)
    b_p = jnp.pad(fc_b.reshape(1, C), ((0, 0), (0, LANES - C)))
    return linear(x_flat, w_t, b_p, C)                      # (B, 10)
    # TODO(synk): a fully-fused conv1+pool+conv2+pool+fc kernel with in-VMEM
    # im2col would remove the remaining (tiny) HBM intermediates.


# --------------------------- Pure-JAX reference ------------------------------

def cnn_reference(x, conv1_w, conv1_b, conv2_w, conv2_b, fc_w, fc_b):
    dn = ('NCHW', 'OIHW', 'NCHW')

    def conv(x, w, b):
        y = jax.lax.conv_general_dilated(
            x, w, window_strides=(1, 1), padding=((1, 1), (1, 1)),
            dimension_numbers=dn, precision=jax.lax.Precision.HIGHEST)
        return y + b.reshape(1, -1, 1, 1)

    def pool(x):
        return jax.lax.reduce_window(x, -jnp.inf, jax.lax.max,
                                     (1, 1, 2, 2), (1, 1, 2, 2), 'VALID')

    x = pool(jax.nn.relu(conv(x, conv1_w, conv1_b)))
    x = pool(jax.nn.relu(conv(x, conv2_w, conv2_b)))
    x = x.reshape(x.shape[0], -1)
    return jnp.dot(x, fc_w.T, precision=jax.lax.Precision.HIGHEST) + fc_b


# --------------------------------- main --------------------------------------

if __name__ == "__main__":
    key = jax.random.PRNGKey(0)
    kx, k1, k2, k3, k4, k5, k6 = jax.random.split(key, 7)

    B, H, W = 2, 28, 28                      # 28x28 input implied by fc1 = 16*7*7
    x = jax.random.normal(kx, (B, 1, H, W), jnp.float32)   # NCHW, like PyTorch

    conv1_w = 0.1 * jax.random.normal(k1, (8, 1, 3, 3), jnp.float32)
    conv1_b = 0.1 * jax.random.normal(k2, (8,), jnp.float32)
    conv2_w = 0.1 * jax.random.normal(k3, (16, 8, 3, 3), jnp.float32)
    conv2_b = 0.1 * jax.random.normal(k4, (16,), jnp.float32)
    fc_w = 0.05 * jax.random.normal(k5, (NUM_CLASSES, 16 * 7 * 7), jnp.float32)
    fc_b = 0.05 * jax.random.normal(k6, (NUM_CLASSES,), jnp.float32)

    out = cnn_forward(x, conv1_w, conv1_b, conv2_w, conv2_b, fc_w, fc_b)
    out = jax.block_until_ready(out)

    ref = cnn_reference(x, conv1_w, conv1_b, conv2_w, conv2_b, fc_w, fc_b)
    assert out.shape == (B, NUM_CLASSES), out.shape
    # kernel uses default (single-pass) MXU precision; reference is full f32
    assert bool(jnp.allclose(out, ref, atol=2e-2, rtol=2e-2)), (
        "Pallas CNN output does not match reference")

    print("KERNEL_OK")
</pallas_src>

<mosaic_0001>
module attributes {stable_mosaic.version = 11 : i64} {
  func.func @conv_relu_pool_kernel(%arg0: i32, %arg1: memref<1x1568x9xf32, #tpu.memory_space<vmem>>, %arg2: memref<9x128xf32, #tpu.memory_space<vmem>>, %arg3: memref<1x128xf32, #tpu.memory_space<vmem>>, %arg4: memref<392x128xf32, #tpu.memory_space<vmem>>) attributes {dimension_semantics = [#tpu.dimension_semantics<parallel>], iteration_bounds = array<i64: 1>, scalar_prefetch = 0 : i64, scratch_operands = 0 : i64, tpu.core_type = #tpu.core_type<tc>, window_params = [{transform_indices = @transform_0, window_bounds = array<i64: 1, 1568, 9>}, {pipeline_mode = #tpu.pipeline_mode<synchronous>, transform_indices = @transform_1, window_bounds = array<i64: 9, 128>}, {pipeline_mode = #tpu.pipeline_mode<synchronous>, transform_indices = @transform_2, window_bounds = array<i64: 1, 128>}, {transform_indices = @transform_3, window_bounds = array<i64: 392, 128>}]} {
    %c0 = arith.constant 0 : index
    %c0_0 = arith.constant 0 : index
    %c0_1 = arith.constant 0 : index
    %0 = vector.load %arg1[%c0, %c0_0, %c0_1] : memref<1x1568x9xf32, #tpu.memory_space<vmem>>, vector<1x1568x9xf32>
    %1 = vector.shape_cast %0 : vector<1x1568x9xf32> to vector<1568x9xf32>
    %c0_2 = arith.constant 0 : index
    %c0_3 = arith.constant 0 : index
    %2 = vector.load %arg2[%c0_2, %c0_3] : memref<9x128xf32, #tpu.memory_space<vmem>>, vector<9x128xf32>
    %cst = arith.constant dense<0.000000e+00> : vector<1568x128xf32>
    %3 = tpu.matmul %1, %2, %cst {dimension_numbers = #tpu.dot_dimension_numbers<[1], [0], [0], [1], [0, 0, 1, 1], [], []>} : vector<1568x9xf32>, vector<9x128xf32>, vector<1568x128xf32> -> vector<1568x128xf32>
    %4 = vector.extract_strided_slice %3 {offsets = [0, 0], sizes = [392, 128], strides = [1, 1]} : vector<1568x128xf32> to vector<392x128xf32>
    %5 = vector.extract_strided_slice %3 {offsets = [392, 0], sizes = [392, 128], strides = [1, 1]} : vector<1568x128xf32> to vector<392x128xf32>
    %6 = arith.maximumf %4, %5 : vector<392x128xf32>
    %7 = vector.extract_strided_slice %3 {offsets = [784, 0], sizes = [392, 128], strides = [1, 1]} : vector<1568x128xf32> to vector<392x128xf32>
    %8 = vector.extract_strided_slice %3 {offsets = [1176, 0], sizes = [392, 128], strides = [1, 1]} : vector<1568x128xf32> to vector<392x128xf32>
    %9 = arith.maximumf %7, %8 : vector<392x128xf32>
    %10 = arith.maximumf %6, %9 : vector<392x128xf32>
    %c0_4 = arith.constant 0 : index
    %c0_5 = arith.constant 0 : index
    %11 = vector.load %arg3[%c0_4, %c0_5] : memref<1x128xf32, #tpu.memory_space<vmem>>, vector<1x128xf32>
    %12 = vector.broadcast %11 : vector<1x128xf32> to vector<392x128xf32>
    %13 = arith.addf %10, %12 : vector<392x128xf32>
    %cst_6 = arith.constant 0.000000e+00 : f32
    %14 = vector.broadcast %cst_6 : f32 to vector<392x128xf32>
    %15 = arith.maximumf %13, %14 : vector<392x128xf32>
    %c0_7 = arith.constant 0 : index
    %c0_8 = arith.constant 0 : index
    %16 = vector.load %arg4[%c0_7, %c0_8] : memref<392x128xf32, #tpu.memory_space<vmem>>, vector<392x128xf32>
    tpu.vector_store %arg4[%c0_7, %c0_8], %15 {strides = array<i32>} : memref<392x128xf32, #tpu.memory_space<vmem>>, vector<392x128xf32>,
    return
  }
  func.func @transform_0(%arg0: i32) -> (i32, i32, i32) {
    %c0_i32 = arith.constant 0 : i32
    %c0_i32_0 = arith.constant 0 : i32
    %c0_i32_1 = arith.constant 0 : i32
    return %arg0, %c0_i32, %c0_i32_0 : i32, i32, i32
  }
  func.func @transform_1(%arg0: i32) -> (i32, i32) {
    %c0_i32 = arith.constant 0 : i32
    %c0_i32_0 = arith.constant 0 : i32
    %c0_i32_1 = arith.constant 0 : i32
    return %c0_i32, %c0_i32_0 : i32, i32
  }
  func.func @transform_2(%arg0: i32) -> (i32, i32) {
    %c0_i32 = arith.constant 0 : i32
    %c0_i32_0 = arith.constant 0 : i32
    %c0_i32_1 = arith.constant 0 : i32
    return %c0_i32, %c0_i32_0 : i32, i32
  }
  func.func @transform_3(%arg0: i32) -> (i32, i32) {
    %c0_i32 = arith.constant 0 : i32
    %c0_i32_0 = arith.constant 0 : i32
    return %arg0, %c0_i32 : i32, i32
  }
}

module attributes {stable_mosaic.version = 11 : i64} {
  func.func @conv_relu_pool_kernel(%arg0: i32, %arg1: memref<1x416x72xf32, #tpu.memory_space<vmem>>, %arg2: memref<72x128xf32, #tpu.memory_space<vmem>>, %arg3: memref<1x128xf32, #tpu.memory_space<vmem>>, %arg4: memref<104x128xf32, #tpu.memory_space<vmem>>) attributes {dimension_semantics = [#tpu.dimension_semantics<parallel>], iteration_bounds = array<i64: 1>, scalar_prefetch = 0 : i64, scratch_operands = 0 : i64, tpu.core_type = #tpu.core_type<tc>, window_params = [{transform_indices = @transform_0, window_bounds = array<i64: 1, 416, 72>}, {pipeline_mode = #tpu.pipeline_mode<synchronous>, transform_indices = @transform_1, window_bounds = array<i64: 72, 128>}, {pipeline_mode = #tpu.pipeline_mode<synchronous>, transform_indices = @transform_2, window_bounds = array<i64: 1, 128>}, {transform_indices = @transform_3, window_bounds = array<i64: 104, 128>}]} {
    %c0 = arith.constant 0 : index
    %c0_0 = arith.constant 0 : index
    %c0_1 = arith.constant 0 : index
    %0 = vector.load %arg1[%c0, %c0_0, %c0_1] : memref<1x416x72xf32, #tpu.memory_space<vmem>>, vector<1x416x72xf32>
    %1 = vector.shape_cast %0 : vector<1x416x72xf32> to vector<416x72xf32>
    %c0_2 = arith.constant 0 : index
    %c0_3 = arith.constant 0 : index
    %2 = vector.load %arg2[%c0_2, %c0_3] : memref<72x128xf32, #tpu.memory_space<vmem>>, vector<72x128xf32>
    %cst = arith.constant dense<0.000000e+00> : vector<416x128xf32>
    %3 = tpu.matmul %1, %2, %cst {dimension_numbers = #tpu.dot_dimension_numbers<[1], [0], [0], [1], [0, 0, 1, 1], [], []>} : vector<416x72xf32>, vector<72x128xf32>, vector<416x128xf32> -> vector<416x128xf32>
    %4 = vector.extract_strided_slice %3 {offsets = [0, 0], sizes = [104, 128], strides = [1, 1]} : vector<416x128xf32> to vector<104x128xf32>
    %5 = vector.extract_strided_slice %3 {offsets = [104, 0], sizes = [104, 128], strides = [1, 1]} : vector<416x128xf32> to vector<104x128xf32>
    %6 = arith.maximumf %4, %5 : vector<104x128xf32>
    %7 = vector.extract_strided_slice %3 {offsets = [208, 0], sizes = [104, 128], strides = [1, 1]} : vector<416x128xf32> to vector<104x128xf32>
    %8 = vector.extract_strided_slice %3 {offsets = [312, 0], sizes = [104, 128], strides = [1, 1]} : vector<416x128xf32> to vector<104x128xf32>
    %9 = arith.maximumf %7, %8 : vector<104x128xf32>
    %10 = arith.maximumf %6, %9 : vector<104x128xf32>
    %c0_4 = arith.constant 0 : index
    %c0_5 = arith.constant 0 : index
    %11 = vector.load %arg3[%c0_4, %c0_5] : memref<1x128xf32, #tpu.memory_space<vmem>>, vector<1x128xf32>
    %12 = vector.broadcast %11 : vector<1x128xf32> to vector<104x128xf32>
    %13 = arith.addf %10, %12 : vector<104x128xf32>
    %cst_6 = arith.constant 0.000000e+00 : f32
    %14 = vector.broadcast %cst_6 : f32 to vector<104x128xf32>
    %15 = arith.maximumf %13, %14 : vector<104x128xf32>
    %c0_7 = arith.constant 0 : index
    %c0_8 = arith.constant 0 : index
    %16 = vector.load %arg4[%c0_7, %c0_8] : memref<104x128xf32, #tpu.memory_space<vmem>>, vector<104x128xf32>
    tpu.vector_store %arg4[%c0_7, %c0_8], %15 {strides = array<i32>} : memref<104x128xf32, #tpu.memory_space<vmem>>, vector<104x128xf32>,
    return
  }
  func.func @transform_0(%arg0: i32) -> (i32, i32, i32) {
    %c0_i32 = arith.constant 0 : i32
    %c0_i32_0 = arith.constant 0 : i32
    %c0_i32_1 = arith.constant 0 : i32
    return %arg0, %c0_i32, %c0_i32_0 : i32, i32, i32
  }
  func.func @transform_1(%arg0: i32) -> (i32, i32) {
    %c0_i32 = arith.constant 0 : i32
    %c0_i32_0 = arith.constant 0 : i32
    %c0_i32_1 = arith.constant 0 : i32
    return %c0_i32, %c0_i32_0 : i32, i32
  }
  func.func @transform_2(%arg0: i32) -> (i32, i32) {
    %c0_i32 = arith.constant 0 : i32
    %c0_i32_0 = arith.constant 0 : i32
    %c0_i32_1 = arith.constant 0 : i32
    return %c0_i32, %c0_i32_0 : i32, i32
  }
  func.func @transform_3(%arg0: i32) -> (i32, i32) {
    %c0_i32 = arith.constant 0 : i32
    %c0_i32_0 = arith.constant 0 : i32
    return %arg0, %c0_i32 : i32, i32
  }
}

module attributes {stable_mosaic.version = 11 : i64} {
  func.func @fc_kernel(%arg0: i32, %arg1: memref<2x784xf32, #tpu.memory_space<vmem>>, %arg2: memref<784x128xf32, #tpu.memory_space<vmem>>, %arg3: memref<1x128xf32, #tpu.memory_space<vmem>>, %arg4: memref<2x128xf32, #tpu.memory_space<vmem>>) attributes {dimension_semantics = [#tpu.dimension_semantics<arbitrary>], iteration_bounds = array<i64: 1>, scalar_prefetch = 0 : i64, scratch_operands = 0 : i64, tpu.core_type = #tpu.core_type<tc>, window_params = [{pipeline_mode = #tpu.pipeline_mode<synchronous>, transform_indices = @transform_0, window_bounds = array<i64: 2, 784>}, {pipeline_mode = #tpu.pipeline_mode<synchronous>, transform_indices = @transform_1, window_bounds = array<i64: 784, 128>}, {pipeline_mode = #tpu.pipeline_mode<synchronous>, transform_indices = @transform_2, window_bounds = array<i64: 1, 128>}, {pipeline_mode = #tpu.pipeline_mode<synchronous>, transform_indices = @transform_3, window_bounds = array<i64: 2, 128>}]} {
    %c0 = arith.constant 0 : index
    %c0_0 = arith.constant 0 : index
    %0 = vector.load %arg1[%c0, %c0_0] : memref<2x784xf32, #tpu.memory_space<vmem>>, vector<2x784xf32>
    %c0_1 = arith.constant 0 : index
    %c0_2 = arith.constant 0 : index
    %1 = vector.load %arg2[%c0_1, %c0_2] : memref<784x128xf32, #tpu.memory_space<vmem>>, vector<784x128xf32>
    %cst = arith.constant dense<0.000000e+00> : vector<2x128xf32>
    %2 = tpu.matmul %0, %1, %cst {dimension_numbers = #tpu.dot_dimension_numbers<[1], [0], [0], [1], [0, 0, 1, 1], [], []>} : vector<2x784xf32>, vector<784x128xf32>, vector<2x128xf32> -> vector<2x128xf32>
    %c0_3 = arith.constant 0 : index
    %c0_4 = arith.constant 0 : index
    %3 = vector.load %arg3[%c0_3, %c0_4] : memref<1x128xf32, #tpu.memory_space<vmem>>, vector<1x128xf32>
    %4 = vector.broadcast %3 : vector<1x128xf32> to vector<2x128xf32>
    %5 = arith.addf %2, %4 : vector<2x128xf32>
    %c0_5 = arith.constant 0 : index
    %c0_6 = arith.constant 0 : index
    %6 = vector.load %arg4[%c0_5, %c0_6] : memref<2x128xf32, #tpu.memory_space<vmem>>, vector<2x128xf32>
    tpu.vector_store %arg4[%c0_5, %c0_6], %5 {strides = array<i32>} : memref<2x128xf32, #tpu.memory_space<vmem>>, vector<2x128xf32>,
    return
  }
  func.func @transform_0(%arg0: i32) -> (i32, i32) {
    %c0_i32 = arith.constant 0 : i32
    %c0_i32_0 = arith.constant 0 : i32
    %c0_i32_1 = arith.constant 0 : i32
    return %c0_i32, %c0_i32_0 : i32, i32
  }
  func.func @transform_1(%arg0: i32) -> (i32, i32) {
    %c0_i32 = arith.constant 0 : i32
    %c0_i32_0 = arith.constant 0 : i32
    %c0_i32_1 = arith.constant 0 : i32
    return %c0_i32, %c0_i32_0 : i32, i32
  }
  func.func @transform_2(%arg0: i32) -> (i32, i32) {
    %c0_i32 = arith.constant 0 : i32
    %c0_i32_0 = arith.constant 0 : i32
    %c0_i32_1 = arith.constant 0 : i32
    return %c0_i32, %c0_i32_0 : i32, i32
  }
  func.func @transform_3(%arg0: i32) -> (i32, i32) {
    %c0_i32 = arith.constant 0 : i32
    %c0_i32_0 = arith.constant 0 : i32
    %c0_i32_1 = arith.constant 0 : i32
    return %c0_i32, %c0_i32_0 : i32, i32
  }
}

</mosaic_0001>

<llo_original>
// kernel: cnn_forward.3
$region0: #{cnn_forward.3}
  #allocation0 [shape = 'u32[]', space=smem, size = 0x4, offset = 0x4, fixed_abs, tag = 'smem constant byte address 0x4 - core index']
  #allocation1 [shape = 'u32[144,128]{1,0:T(1,128)}', space=vmem, size = 0x12000, scoped, tag = 'internal scratch']
  %s0 = inlined_call_operand.vmem [shape: f32[1,1568,9], index: 0, kind: input, shape index: {}]
  %s1 = inlined_call_operand.vmem [shape: f32[9,128], index: 1, kind: input, shape index: {}]
  %s2 = inlined_call_operand.vmem [shape: f32[1,128], index: 2, kind: input, shape index: {}]
  %s3 = inlined_call_operand.vmem [shape: f32[392,128], index: 3, kind: output, shape index: {}]
  %s4 = sld [smem:[#allocation0]]
  $region22: #{cnn_forward.3} parent=0
    _
  %s6 = ssub.s32 1, %s4
  %s7 = scalar_select 0, %s6, %s4
  // Predicated region
  $region2: #{cnn_forward.3} parent=0 // pred_check
    _
  $region3: #{cnn_forward.3} parent=0 // pred_check_branch
    %9 = sbr.rel (0) target = $region5
  $region4: #{cnn_forward.3} parent=0 // pred_region
    _
  $region5: #{cnn_forward.3} parent=0 // pred_fallthru
    _
  // Predicated region
  $region6: #{cnn_forward.3} parent=0 // pred_check
    _
  $region7: #{cnn_forward.3} parent=0 // pred_check_branch
    %11 = sbr.rel (0) target = $region9
  $region8: #{cnn_forward.3} parent=0 // pred_region
    _
  $region9: #{cnn_forward.3} parent=0 // pred_fallthru
    _
  // Predicated region
  $region10: #{cnn_forward.3} parent=0 // pred_check
    _
  $region11: #{cnn_forward.3} parent=0 // pred_check_branch
    %13 = sbr.rel (0) target = $region13
  $region12: #{cnn_forward.3} parent=0 // pred_region
    _
  $region13: #{cnn_forward.3} parent=0 // pred_fallthru
    _
  %v14 = vld [vmem:[%s0] sm:$0xff]
  %v15 = vld [vmem:[%s0 + $0x8] sm:$0xff]
  %v16 = vld [vmem:[%s0 + $0x10] sm:$0xff]
  %v17 = vld [vmem:[%s0 + $0x18] sm:$0xff]
  %v18 = vld [vmem:[%s0 + $0x20] sm:$0xff]
  %v19 = vld [vmem:[%s0 + $0x28] sm:$0xff]
  %v20 = vld [vmem:[%s0 + $0x30] sm:$0xff]
  %v21 = vld [vmem:[%s0 + $0x38] sm:$0xff]
  %v22 = vld [vmem:[%s0 + $0x40] sm:$0xff]
  %v23 = vld [vmem:[%s0 + $0x48] sm:$0xff]
  %v24 = vld [vmem:[%s0 + $0x50] sm:$0xff]
  %v25 = vld [vmem:[%s0 + $0x58] sm:$0xff]
  %v26 = vld [vmem:[%s0 + $0x60] sm:$0xff]
  %v27 = vld [vmem:[%s0 + $0x68] sm:$0xff]
  %v28 = vld [vmem:[%s0 + $0x70] sm:$0xff]
  %v29 = vld [vmem:[%s0 + $0x78] sm:$0xff]
  %v30 = vld [vmem:[%s0 + $0x80] sm:$0xff]
  %v31 = vld [vmem:[%s0 + $0x88] sm:$0xff]
  %v32 = vld [vmem:[%s0 + $0x90] sm:$0xff]
  %v33 = vld [vmem:[%s0 + $0x98] sm:$0xff]
  %v34 = vld [vmem:[%s0 + $0xa0] sm:$0xff]
  %v35 = vld [vmem:[%s0 + $0xa8] sm:$0xff]
  %v36 = vld [vmem:[%s0 + $0xb0] sm:$0xff]
  %v37 = vld [vmem:[%s0 + $0xb8] sm:$0xff]
  %v38 = vld [vmem:[%s0 + $0xc0] sm:$0xff]
  %v39 = vld [vmem:[%s0 + $0xc8] sm:$0xff]
  %v40 = vld [vmem:[%s0 + $0xd0] sm:$0xff]
  %v41 = vld [vmem:[%s0 + $0xd8] sm:$0xff]
  %v42 = vld [vmem:[%s0 + $0xe0] sm:$0xff]
  %v43 = vld [vmem:[%s0 + $0xe8] sm:$0xff]
  %v44 = vld [vmem:[%s0 + $0xf0] sm:$0xff]
  %v45 = vld [vmem:[%s0 + $0xf8] sm:$0xff]
  %v46 = vld [vmem:[%s0 + $0x100] sm:$0xff]
  %v47 = vld [vmem:[%s0 + $0x108] sm:$0xff]
  %v48 = vld [vmem:[%s0 + $0x110] sm:$0xff]
  %v49 = vld [vmem:[%s0 + $0x118] sm:$0xff]
  %v50 = vld [vmem:[%s0 + $0x120] sm:$0xff]
  %v51 = vld [vmem:[%s0 + $0x128] sm:$0xff]
  %v52 = vld [vmem:[%s0 + $0x130] sm:$0xff]
  %v53 = vld [vmem:[%s0 + $0x138] sm:$0xff]
  %v54 = vld [vmem:[%s0 + $0x140] sm:$0xff]
  %v55 = vld [vmem:[%s0 + $0x148] sm:$0xff]
  %v56 = vld [vmem:[%s0 + $0x150] sm:$0xff]
  %v57 = vld [vmem:[%s0 + $0x158] sm:$0xff]
  %v58 = vld [vmem:[%s0 + $0x160] sm:$0xff]
  %v59 = vld [vmem:[%s0 + $0x168] sm:$0xff]
  %v60 = vld [vmem:[%s0 + $0x170] sm:$0xff]
  %v61 = vld [vmem:[%s0 + $0x178] sm:$0xff]
  %v62 = vld [vmem:[%s0 + $0x180] sm:$0xff]
  %v63 = vld [vmem:[%s0 + $0x188] sm:$0xff]
  %v64 = vld [vmem:[%s0 + $0x190] sm:$0xff]
  %v65 = vld [vmem:[%s0 + $0x198] sm:$0xff]
  %v66 = vld [vmem:[%s0 + $0x1a0] sm:$0xff]
  %v67 = vld [vmem:[%s0 + $0x1a8] sm:$0xff]
  %v68 = vld [vmem:[%s0 + $0x1b0] sm:$0xff]
  %v69 = vld [vmem:[%s0 + $0x1b8] sm:$0xff]
  %v70 = vld [vmem:[%s0 + $0x1c0] sm:$0xff]
  %v71 = vld [vmem:[%s0 + $0x1c8] sm:$0xff]
  %v72 = vld [vmem:[%s0 + $0x1d0] sm:$0xff]
  %v73 = vld [vmem:[%s0 + $0x1d8] sm:$0xff]
  %v74 = vld [vmem:[%s0 + $0x1e0] sm:$0xff]
  %v75 = vld [vmem:[%s0 + $0x1e8] sm:$0xff]
  %v76 = vld [vmem:[%s0 + $0x1f0] sm:$0xff]
  %v77 = vld [vmem:[%s0 + $0x1f8] sm:$0xff]
  %v78 = vld [vmem:[%s0 + $0x200] sm:$0xff]
  %v79 = vld [vmem:[%s0 + $0x208] sm:$0xff]
  %v80 = vld [vmem:[%s0 + $0x210] sm:$0xff]
  %v81 = vld [vmem:[%s0 + $0x218] sm:$0xff]
  %v82 = vld [vmem:[%s0 + $0x220] sm:$0xff]
  %v83 = vld [vmem:[%s0 + $0x228] sm:$0xff]
  %v84 = vld [vmem:[%s0 + $0x230] sm:$0xff]
  %v85 = vld [vmem:[%s0 + $0x238] sm:$0xff]
  %v86 = vld [vmem:[%s0 + $0x240] sm:$0xff]
  %v87 = vld [vmem:[%s0 + $0x248] sm:$0xff]
  %v88 = vld [vmem:[%s0 + $0x250] sm:$0xff]
  %v89 = vld [vmem:[%s0 + $0x258] sm:$0xff]
  %v90 = vld [vmem:[%s0 + $0x260] sm:$0xff]
  %v91 = vld [vmem:[%s0 + $0x268] sm:$0xff]
  %v92 = vld [vmem:[%s0 + $0x270] sm:$0xff]
  %v93 = vld [vmem:[%s0 + $0x278] sm:$0xff]
  %v94 = vld [vmem:[%s0 + $0x280] sm:$0xff]
  %v95 = vld [vmem:[%s0 + $0x288] sm:$0xff]
  %v96 = vld [vmem:[%s0 + $0x290] sm:$0xff]
  %v97 = vld [vmem:[%s0 + $0x298] sm:$0xff]
  %v98 = vld [vmem:[%s0 + $0x2a0] sm:$0xff]
  %v99 = vld [vmem:[%s0 + $0x2a8] sm:$0xff]
  %v100 = vld [vmem:[%s0 + $0x2b0] sm:$0xff]
  %v101 = vld [vmem:[%s0 + $0x2b8] sm:$0xff]
  %v102 = vld [vmem:[%s0 + $0x2c0] sm:$0xff]
  %v103 = vld [vmem:[%s0 + $0x2c8] sm:$0xff]
  %v104 = vld [vmem:[%s0 + $0x2d0] sm:$0xff]
  %v105 = vld [vmem:[%s0 + $0x2d8] sm:$0xff]
  %v106 = vld [vmem:[%s0 + $0x2e0] sm:$0xff]
  %v107 = vld [vmem:[%s0 + $0x2e8] sm:$0xff]
  %v108 = vld [vmem:[%s0 + $0x2f0] sm:$0xff]
  %v109 = vld [vmem:[%s0 + $0x2f8] sm:$0xff]
  %v110 = vld [vmem:[%s0 + $0x300] sm:$0xff]
  %v111 = vld [vmem:[%s0 + $0x308] sm:$0xff]
  %v112 = vld [vmem:[%s0 + $0x310] sm:$0xff]
  %v113 = vld [vmem:[%s0 + $0x318] sm:$0xff]
  %v114 = vld [vmem:[%s0 + $0x320] sm:$0xff]
  %v115 = vld [vmem:[%s0 + $0x328] sm:$0xff]
  %v116 = vld [vmem:[%s0 + $0x330] sm:$0xff]
  %v117 = vld [vmem:[%s0 + $0x338] sm:$0xff]
  %v118 = vld [vmem:[%s0 + $0x340] sm:$0xff]
  %v119 = vld [vmem:[%s0 + $0x348] sm:$0xff]
  %v120 = vld [vmem:[%s0 + $0x350] sm:$0xff]
  %v121 = vld [vmem:[%s0 + $0x358] sm:$0xff]
  %v122 = vld [vmem:[%s0 + $0x360] sm:$0xff]
  %v123 = vld [vmem:[%s0 + $0x368] sm:$0xff]
  %v124 = vld [vmem:[%s0 + $0x370] sm:$0xff]
  %v125 = vld [vmem:[%s0 + $0x378] sm:$0xff]
  %v126 = vld [vmem:[%s0 + $0x380] sm:$0xff]
  %v127 = vld [vmem:[%s0 + $0x388] sm:$0xff]
  %v128 = vld [vmem:[%s0 + $0x390] sm:$0xff]
  %v129 = vld [vmem:[%s0 + $0x398] sm:$0xff]
  %v130 = vld [vmem:[%s0 + $0x3a0] sm:$0xff]
  %v131 = vld [vmem:[%s0 + $0x3a8] sm:$0xff]
  %v132 = vld [vmem:[%s0 + $0x3b0] sm:$0xff]
  %v133 = vld [vmem:[%s0 + $0x3b8] sm:$0xff]
  %v134 = vld [vmem:[%s0 + $0x3c0] sm:$0xff]
  %v135 = vld [vmem:[%s0 + $0x3c8] sm:$0xff]
  %v136 = vld [vmem:[%s0 + $0x3d0] sm:$0xff]
  %v137 = vld [vmem:[%s0 + $0x3d8] sm:$0xff]
  %v138 = vld [vmem:[%s0 + $0x3e0] sm:$0xff]
  %v139 = vld [vmem:[%s0 + $0x3e8] sm:$0xff]
  %v140 = vld [vmem:[%s0 + $0x3f0] sm:$0xff]
  %v141 = vld [vmem:[%s0 + $0x3f8] sm:$0xff]
  %v142 = vld [vmem:[%s0 + $0x400] sm:$0xff]
  %v143 = vld [vmem:[%s0 + $0x408] sm:$0xff]
  %v144 = vld [vmem:[%s0 + $0x410] sm:$0xff]
  %v145 = vld [vmem:[%s0 + $0x418] sm:$0xff]
  %v146 = vld [vmem:[%s0 + $0x420] sm:$0xff]
  %v147 = vld [vmem:[%s0 + $0x428] sm:$0xff]
  %v148 = vld [vmem:[%s0 + $0x430] sm:$0xff]
  %v149 = vld [vmem:[%s0 + $0x438] sm:$0xff]
  %v150 = vld [vmem:[%s0 + $0x440] sm:$0xff]
  %v151 = vld [vmem:[%s0 + $0x448] sm:$0xff]
  %v152 = vld [vmem:[%s0 + $0x450] sm:$0xff]
  %v153 = vld [vmem:[%s0 + $0x458] sm:$0xff]
  %v154 = vld [vmem:[%s0 + $0x460] sm:$0xff]
  %v155 = vld [vmem:[%s0 + $0x468] sm:$0xff]
  %v156 = vld [vmem:[%s0 + $0x470] sm:$0xff]
  %v157 = vld [vmem:[%s0 + $0x478] sm:$0xff]
  %v158 = vld [vmem:[%s0 + $0x480] sm:$0xff]
  %v159 = vld [vmem:[%s0 + $0x488] sm:$0xff]
  %v160 = vld [vmem:[%s0 + $0x490] sm:$0xff]
  %v161 = vld [vmem:[%s0 + $0x498] sm:$0xff]
  %v162 = vld [vmem:[%s0 + $0x4a0] sm:$0xff]
  %v163 = vld [vmem:[%s0 + $0x4a8] sm:$0xff]
  %v164 = vld [vmem:[%s0 + $0x4b0] sm:$0xff]
  %v165 = vld [vmem:[%s0 + $0x4b8] sm:$0xff]
  %v166 = vld [vmem:[%s0 + $0x4c0] sm:$0xff]
  %v167 = vld [vmem:[%s0 + $0x4c8] sm:$0xff]
  %v168 = vld [vmem:[%s0 + $0x4d0] sm:$0xff]
  %v169 = vld [vmem:[%s0 + $0x4d8] sm:$0xff]
  %v170 = vld [vmem:[%s0 + $0x4e0] sm:$0xff]
  %v171 = vld [vmem:[%s0 + $0x4e8] sm:$0xff]
  %v172 = vld [vmem:[%s0 + $0x4f0] sm:$0xff]
  %v173 = vld [vmem:[%s0 + $0x4f8] sm:$0xff]
  %v174 = vld [vmem:[%s0 + $0x500] sm:$0xff]
  %v175 = vld [vmem:[%s0 + $0x508] sm:$0xff]
  %v176 = vld [vmem:[%s0 + $0x510] sm:$0xff]
  %v177 = vld [vmem:[%s0 + $0x518] sm:$0xff]
  %v178 = vld [vmem:[%s0 + $0x520] sm:$0xff]
  %v179 = vld [vmem:[%s0 + $0x528] sm:$0xff]
  %v180 = vld [vmem:[%s0 + $0x530] sm:$0xff]
  %v181 = vld [vmem:[%s0 + $0x538] sm:$0xff]
  %v182 = vld [vmem:[%s0 + $0x540] sm:$0xff]
  %v183 = vld [vmem:[%s0 + $0x548] sm:$0xff]
  %v184 = vld [vmem:[%s0 + $0x550] sm:$0xff]
  %v185 = vld [vmem:[%s0 + $0x558] sm:$0xff]
  %v186 = vld [vmem:[%s0 + $0x560] sm:$0xff]
  %v187 = vld [vmem:[%s0 + $0x568] sm:$0xff]
  %v188 = vld [vmem:[%s0 + $0x570] sm:$0xff]
  %v189 = vld [vmem:[%s0 + $0x578] sm:$0xff]
  %v190 = vld [vmem:[%s0 + $0x580] sm:$0xff]
  %v191 = vld [vmem:[%s0 + $0x588] sm:$0xff]
  %v192 = vld [vmem:[%s0 + $0x590] sm:$0xff]
  %v193 = vld [vmem:[%s0 + $0x598] sm:$0xff]
  %v194 = vld [vmem:[%s0 + $0x5a0] sm:$0xff]
  %v195 = vld [vmem:[%s0 + $0x5a8] sm:$0xff]
  %v196 = vld [vmem:[%s0 + $0x5b0] sm:$0xff]
  %v197 = vld [vmem:[%s0 + $0x5b8] sm:$0xff]
  %v198 = vld [vmem:[%s0 + $0x5c0] sm:$0xff]
  %v199 = vld [vmem:[%s0 + $0x5c8] sm:$0xff]
  %v200 = vld [vmem:[%s0 + $0x5d0] sm:$0xff]
  %v201 = vld [vmem:[%s0 + $0x5d8] sm:$0xff]
  %v202 = vld [vmem:[%s0 + $0x5e0] sm:$0xff]
  %v203 = vld [vmem:[%s0 + $0x5e8] sm:$0xff]
  %v204 = vld [vmem:[%s0 + $0x5f0] sm:$0xff]
  %v205 = vld [vmem:[%s0 + $0x5f8] sm:$0xff]
  %v206 = vld [vmem:[%s0 + $0x600] sm:$0xff]
  %v207 = vld [vmem:[%s0 + $0x608] sm:$0xff]
  %v208 = vld [vmem:[%s0 + $0x610] sm:$0xff]
  %v209 = vld [vmem:[%s0 + $0x618] sm:$0xff]
  %v210 = vld [vmem:[%s1] sm:$0xff]
  %v211 = vld [vmem:[%s1 + $0x8] sm:$0x1]
  %vm212 = vcmask 72704
  %v214 = vsel %vm212, %v14, 0
  %v217 = vsel %vm212, %v15, 0
  %v220 = vsel %vm212, %v16, 0
  %v223 = vsel %vm212, %v17, 0
  %v226 = vsel %vm212, %v18, 0
  %v229 = vsel %vm212, %v19, 0
  %v232 = vsel %vm212, %v20, 0
  %v235 = vsel %vm212, %v21, 0
  %v238 = vsel %vm212, %v22, 0
  %v241 = vsel %vm212, %v23, 0
  %v244 = vsel %vm212, %v24, 0
  %v247 = vsel %vm212, %v25, 0
  %v250 = vsel %vm212, %v26, 0
  %v253 = vsel %vm212, %v27, 0
  %v256 = vsel %vm212, %v28, 0
  %v259 = vsel %vm212, %v29, 0
  %v262 = vsel %vm212, %v30, 0
  %v265 = vsel %vm212, %v31, 0
  %v268 = vsel %vm212, %v32, 0
  %v271 = vsel %vm212, %v33, 0
  %v274 = vsel %vm212, %v34, 0
  %v277 = vsel %vm212, %v35, 0
  %v280 = vsel %vm212, %v36, 0
  %v283 = vsel %vm212, %v37, 0
  %v286 = vsel %vm212, %v38, 0
  %v289 = vsel %vm212, %v39, 0
  %v292 = vsel %vm212, %v40, 0
  %v295 = vsel %vm212, %v41, 0
  %v298 = vsel %vm212, %v42, 0
  %v301 = vsel %vm212, %v43, 0
  %v304 = vsel %vm212, %v44, 0
  %v307 = vsel %vm212, %v45, 0
  %v310 = vsel %vm212, %v46, 0
  %v313 = vsel %vm212, %v47, 0
  %v316 = vsel %vm212, %v48, 0
  %v319 = vsel %vm212, %v49, 0
  %v322 = vsel %vm212, %v50, 0
  %v325 = vsel %vm212, %v51, 0
  %v328 = vsel %vm212, %v52, 0
  %v331 = vsel %vm212, %v53, 0
  %v334 = vsel %vm212, %v54, 0
  %v337 = vsel %vm212, %v55, 0
  %v340 = vsel %vm212, %v56, 0
  %v343 = vsel %vm212, %v57, 0
  %v346 = vsel %vm212, %v58, 0
  %v349 = vsel %vm212, %v59, 0
  %v352 = vsel %vm212, %v60, 0
  %v355 = vsel %vm212, %v61, 0
  %v358 = vsel %vm212, %v62, 0
  %v361 = vsel %vm212, %v63, 0
  %v364 = vsel %vm212, %v64, 0
  %v367 = vsel %vm212, %v65, 0
  %v370 = vsel %vm212, %v66, 0
  %v373 = vsel %vm212, %v67, 0
  %v376 = vsel %vm212, %v68, 0
  %v379 = vsel %vm212, %v69, 0
  %v382 = vsel %vm212, %v70, 0
  %v385 = vsel %vm212, %v71, 0
  %v388 = vsel %vm212, %v72, 0
  %v391 = vsel %vm212, %v73, 0
  %v394 = vsel %vm212, %v74, 0
  %v397 = vsel %vm212, %v75, 0
  %v400 = vsel %vm212, %v76, 0
  %v403 = vsel %vm212, %v77, 0
  %v406 = vsel %vm212, %v78, 0
  %v409 = vsel %vm212, %v79, 0
  %v412 = vsel %vm212, %v80, 0
  %v415 = vsel %vm212, %v81, 0
  %v418 = vsel %vm212, %v82, 0
  %v421 = vsel %vm212, %v83, 0
  %v424 = vsel %vm212, %v84, 0
  %v427 = vsel %vm212, %v85, 0
  %v430 = vsel %vm212, %v86, 0
  %v433 = vsel %vm212, %v87, 0
  %v436 = vsel %vm212, %v88, 0
  %v439 = vsel %vm212, %v89, 0
  %v442 = vsel %vm212, %v90, 0
  %v445 = vsel %vm212, %v91, 0
  %v448 = vsel %vm212, %v92, 0
  %v451 = vsel %vm212, %v93, 0
  %v454 = vsel %vm212, %v94, 0
  %v457 = vsel %vm212, %v95, 0
  %v460 = vsel %vm212, %v96, 0
  %v463 = vsel %vm212, %v97, 0
  %v466 = vsel %vm212, %v98, 0
  %v469 = vsel %vm212, %v99, 0
  %v472 = vsel %vm212, %v100, 0
  %v475 = vsel %vm212, %v101, 0
  %v478 = vsel %vm212, %v102, 0
  %v481 = vsel %vm212, %v103, 0
  %v484 = vsel %vm212, %v104, 0
  %v487 = vsel %vm212, %v105, 0
  %v490 = vsel %vm212, %v106, 0
  %v493 = vsel %vm212, %v107, 0
  %v496 = vsel %vm212, %v108, 0
  %v499 = vsel %vm212, %v109, 0
  %v502 = vsel %vm212, %v110, 0
  %v505 = vsel %vm212, %v111, 0
  %v508 = vsel %vm212, %v112, 0
  %v511 = vsel %vm212, %v113, 0
  %v514 = vsel %vm212, %v114, 0
  %v517 = vsel %vm212, %v115, 0
  %v520 = vsel %vm212, %v116, 0
  %v523 = vsel %vm212, %v117, 0
  %v526 = vsel %vm212, %v118, 0
  %v529 = vsel %vm212, %v119, 0
  %v532 = vsel %vm212, %v120, 0
  %v535 = vsel %vm212, %v121, 0
  %v538 = vsel %vm212, %v122, 0
  %v541 = vsel %vm212, %v123, 0
  %v544 = vsel %vm212, %v124, 0
  %v547 = vsel %vm212, %v125, 0
  %v550 = vsel %vm212, %v126, 0
  %v553 = vsel %vm212, %v127, 0
  %v556 = vsel %vm212, %v128, 0
  %v559 = vsel %vm212, %v129, 0
  %v562 = vsel %vm212, %v130, 0
  %v565 = vsel %vm212, %v131, 0
  %v568 = vsel %vm212, %v132, 0
  %v571 = vsel %vm212, %v133, 0
  %v574 = vsel %vm212, %v134, 0
  %v577 = vsel %vm212, %v135, 0
  %v580 = vsel %vm212, %v136, 0
  %v583 = vsel %vm212, %v137, 0
  %v586 = vsel %vm212, %v138, 0
  %v589 = vsel %vm212, %v139, 0
  %v592 = vsel %vm212, %v140, 0
  %v595 = vsel %vm212, %v141, 0
  %v598 = vsel %vm212, %v142, 0
  %v601 = vsel %vm212, %v143, 0
  %v604 = vsel %vm212, %v144, 0
  %v607 = vsel %vm212, %v145, 0
  %v610 = vsel %vm212, %v146, 0
  %v613 = vsel %vm212, %v147, 0
  %v616 = vsel %vm212, %v148, 0
  %v619 = vsel %vm212, %v149, 0
  %v622 = vsel %vm212, %v150, 0
  %v625 = vsel %vm212, %v151, 0
  %v628 = vsel %vm212, %v152, 0
  %v631 = vsel %vm212, %v153, 0
  %v634 = vsel %vm212, %v154, 0
  %v637 = vsel %vm212, %v155, 0
  %v640 = vsel %vm212, %v156, 0
  %v643 = vsel %vm212, %v157, 0
  %v646 = vsel %vm212, %v158, 0
  %v649 = vsel %vm212, %v159, 0
  %v652 = vsel %vm212, %v160, 0
  %v655 = vsel %vm212, %v161, 0
  %v658 = vsel %vm212, %v162, 0
  %v661 = vsel %vm212, %v163, 0
  %v664 = vsel %vm212, %v164, 0
  %v667 = vsel %vm212, %v165, 0
  %v670 = vsel %vm212, %v166, 0
  %v673 = vsel %vm212, %v167, 0
  %v676 = vsel %vm212, %v168, 0
  %v679 = vsel %vm212, %v169, 0
  %v682 = vsel %vm212, %v170, 0
  %v685 = vsel %vm212, %v171, 0
  %v688 = vsel %vm212, %v172, 0
  %v691 = vsel %vm212, %v173, 0
  %v694 = vsel %vm212, %v174, 0
  %v697 = vsel %vm212, %v175, 0
  %v700 = vsel %vm212, %v176, 0
  %v703 = vsel %vm212, %v177, 0
  %v706 = vsel %vm212, %v178, 0
  %v709 = vsel %vm212, %v179, 0
  %v712 = vsel %vm212, %v180, 0
  %v715 = vsel %vm212, %v181, 0
  %v718 = vsel %vm212, %v182, 0
  %v721 = vsel %vm212, %v183, 0
  %v724 = vsel %vm212, %v184, 0
  %v727 = vsel %vm212, %v185, 0
  %v730 = vsel %vm212, %v186, 0
  %v733 = vsel %vm212, %v187, 0
  %v736 = vsel %vm212, %v188, 0
  %v739 = vsel %vm212, %v189, 0
  %v742 = vsel %vm212, %v190, 0
  %v745 = vsel %vm212, %v191, 0
  %v748 = vsel %vm212, %v192, 0
  %v751 = vsel %vm212, %v193, 0
  %v754 = vsel %vm212, %v194, 0
  %v757 = vsel %vm212, %v195, 0
  %v760 = vsel %vm212, %v196, 0
  %v763 = vsel %vm212, %v197, 0
  %v766 = vsel %vm212, %v198, 0
  %v769 = vsel %vm212, %v199, 0
  %v772 = vsel %vm212, %v200, 0
  %v775 = vsel %vm212, %v201, 0
  %v778 = vsel %vm212, %v202, 0
  %v781 = vsel %vm212, %v203, 0
  %v784 = vsel %vm212, %v204, 0
  %v787 = vsel %vm212, %v205, 0
  %v790 = vsel %vm212, %v206, 0
  %v793 = vsel %vm212, %v207, 0
  %v796 = vsel %vm212, %v208, 0
  %v799 = vsel %vm212, %v209, 0
  %vm801 = vcmask 1040384
  %v803 = vsel %vm801, %v211, 0
  %805 = vmatprep.subr.mxu0 0.0
  %806 = vmatpush1.msra.mxu0 0.0
  %807 = vmatprep.subr.mxu0 0.0
  %808 = vmatpush1.msra.mxu0 0.0
  %809 = vmatprep.subr.mxu0 0.0
  %810 = vmatpush1.msra.mxu0 0.0
  %811 = vmatprep.subr.mxu0 0.0
  %812 = vmatpush1.msra.mxu0 0.0
  %813 = vmatprep.subr.mxu0 0.0
  %814 = vmatpush1.msra.mxu0 0.0
  %815 = vmatprep.subr.mxu0 0.0
  %816 = vmatpush1.msra.mxu0 0.0
  %817 = vmatprep.subr.mxu0 0.0
  %818 = vmatpush1.msra.mxu0 0.0
  %819 = vmatprep.subr.mxu0 0.0
  %820 = vmatpush1.msra.mxu0 0.0
  %821 = vmatprep.subr.mxu0 0.0
  %822 = vmatpush1.msra.mxu0 0.0
  %823 = vmatprep.subr.mxu0 0.0
  %824 = vmatpush1.msra.mxu0 0.0
  %825 = vmatprep.subr.mxu0 0.0
  %826 = vmatpush1.msra.mxu0 0.0
  %827 = vmatprep.subr.mxu0 0.0
  %828 = vmatpush1.msra.mxu0 0.0
  %829 = vmatprep.subr.mxu0 0.0
  %830 = vmatpush1.msra.mxu0 0.0
  %831 = vmatprep.subr.mxu0 0.0
  %832 = vmatpush1.msra.mxu0 0.0
  %833 = vmatprep.subr.mxu0 0.0
  %834 = vmatpush1.msra.mxu0 %v803
  %835 = vmatprep.subr.mxu0 0.0
  %836 = vmatpush1.msra.mxu0 %v210
  %837 = vmatprep.subr.mxu0 0.0
  %838 = vmatpush2.msra.mxu0 0.0
  %839 = vmatprep.subr.mxu0 0.0
  %840 = vmatpush2.msra.mxu0 0.0
  %841 = vmatprep.subr.mxu0 0.0
  %842 = vmatpush2.msra.mxu0 0.0
  %843 = vmatprep.subr.mxu0 0.0
  %844 = vmatpush2.msra.mxu0 0.0
  %845 = vmatprep.subr.mxu0 0.0
  %846 = vmatpush2.msra.mxu0 0.0
  %847 = vmatprep.subr.mxu0 0.0
  %848 = vmatpush2.msra.mxu0 0.0
  %849 = vmatprep.subr.mxu0 0.0
  %850 = vmatpush2.msra.mxu0 0.0
  %851 = vmatprep.subr.mxu0 0.0
  %852 = vmatpush2.msra.mxu0 0.0
  %853 = vmatprep.subr.mxu0 0.0
  %854 = vmatpush2.msra.mxu0 0.0
  %855 = vmatprep.subr.mxu0 0.0
  %856 = vmatpush2.msra.mxu0 0.0
  %857 = vmatprep.subr.mxu0 0.0
  %858 = vmatpush2.msra.mxu0 0.0
  %859 = vmatprep.subr.mxu0 0.0
  %860 = vmatpush2.msra.mxu0 0.0
  %861 = vmatprep.subr.mxu0 0.0
  %862 = vmatpush2.msra.mxu0 0.0
  %863 = vmatprep.subr.mxu0 0.0
  %864 = vmatpush2.msra.mxu0 0.0
  %865 = vmatprep.subr.mxu0 0.0
  %866 = vmatpush2.msra.mxu0 0.0
  %867 = vmatprep.subr.mxu0 0.0
  %868 = vmatpush2.msra.mxu0 0.0
  %869 = vmatprep.mubr.f32.mxu0 0.0
  %870 = vmatmul.mubr.f32.gmra.mxu0 %v214
  %v871 = vpop.f32.mrf.mxu0
  %v872 = vadd.f32 0.0, %v871
  %v873 = vpop.f32.mrf.mxu0
  %874 = vmatprep.mubr.f32.mxu0 0.0
  %875 = vmatmul.mubr.f32.gmra.mxu0 %v217
  %v876 = vpop.f32.mrf.mxu0
  %v877 = vadd.f32 0.0, %v876
  %v878 = vpop.f32.mrf.mxu0
  %879 = vmatprep.mubr.f32.mxu0 0.0
  %880 = vmatmul.mubr.f32.gmra.mxu0 %v220
  %v881 = vpop.f32.mrf.mxu0
  %v882 = vadd.f32 0.0, %v881
  %v883 = vpop.f32.mrf.mxu0
  %884 = vmatprep.mubr.f32.mxu0 0.0
  %885 = vmatmul.mubr.f32.gmra.mxu0 %v223
  %v886 = vpop.f32.mrf.mxu0
  %v887 = vadd.f32 0.0, %v886
  %v888 = vpop.f32.mrf.mxu0
  %889 = vmatprep.mubr.f32.mxu0 0.0
  %890 = vmatmul.mubr.f32.gmra.mxu0 %v226
  %v891 = vpop.f32.mrf.mxu0
  %v892 = vadd.f32 0.0, %v891
  %v893 = vpop.f32.mrf.mxu0
  %894 = vmatprep.mubr.f32.mxu0 0.0
  %895 = vmatmul.mubr.f32.gmra.mxu0 %v229
  %v896 = vpop.f32.mrf.mxu0
  %v897 = vadd.f32 0.0, %v896
  %v898 = vpop.f32.mrf.mxu0
  %899 = vmatprep.mubr.f32.mxu0 0.0
  %900 = vmatmul.mubr.f32.gmra.mxu0 %v232
  %v901 = vpop.f32.mrf.mxu0
  %v902 = vadd.f32 0.0, %v901
  %v903 = vpop.f32.mrf.mxu0
  %904 = vmatprep.mubr.f32.mxu0 0.0
  %905 = vmatmul.mubr.f32.gmra.mxu0 %v235
  %v906 = vpop.f32.mrf.mxu0
  %v907 = vadd.f32 0.0, %v906
  %v908 = vpop.f32.mrf.mxu0
  %909 = vmatprep.mubr.f32.mxu0 0.0
  %910 = vmatmul.mubr.f32.gmra.mxu0 %v238
  %v911 = vpop.f32.mrf.mxu0
  %v912 = vadd.f32 0.0, %v911
  %v913 = vpop.f32.mrf.mxu0
  %914 = vmatprep.mubr.f32.mxu0 0.0
  %915 = vmatmul.mubr.f32.gmra.mxu0 %v241
  %v916 = vpop.f32.mrf.mxu0
  %v917 = vadd.f32 0.0, %v916
  %v918 = vpop.f32.mrf.mxu0
  %919 = vmatprep.mubr.f32.mxu0 0.0
  %920 = vmatmul.mubr.f32.gmra.mxu0 %v244
  %v921 = vpop.f32.mrf.mxu0
  %v922 = vadd.f32 0.0, %v921
  %v923 = vpop.f32.mrf.mxu0
  %924 = vmatprep.mubr.f32.mxu0 0.0
  %925 = vmatmul.mubr.f32.gmra.mxu0 %v247
  %v926 = vpop.f32.mrf.mxu0
  %v927 = vadd.f32 0.0, %v926
  %v928 = vpop.f32.mrf.mxu0
  %929 = vmatprep.mubr.f32.mxu0 0.0
  %930 = vmatmul.mubr.f32.gmra.mxu0 %v250
  %v931 = vpop.f32.mrf.mxu0
  %v932 = vadd.f32 0.0, %v931
  %v933 = vpop.f32.mrf.mxu0
  %934 = vmatprep.mubr.f32.mxu0 0.0
  %935 = vmatmul.mubr.f32.gmra.mxu0 %v253
  %v936 = vpop.f32.mrf.mxu0
  %v937 = vadd.f32 0.0, %v936
  %v938 = vpop.f32.mrf.mxu0
  %939 = vmatprep.mubr.f32.mxu0 0.0
  %940 = vmatmul.mubr.f32.gmra.mxu0 %v256
  %v941 = vpop.f32.mrf.mxu0
  %v942 = vadd.f32 0.0, %v941
  %v943 = vpop.f32.mrf.mxu0
  %944 = vmatprep.mubr.f32.mxu0 0.0
  %945 = vmatmul.mubr.f32.gmra.mxu0 %v259
  %v946 = vpop.f32.mrf.mxu0
  %v947 = vadd.f32 0.0, %v946
  %v948 = vpop.f32.mrf.mxu0
  %949 = vmatprep.mubr.f32.mxu0 0.0
  %950 = vmatmul.mubr.f32.gmra.mxu0 %v262
  %v951 = vpop.f32.mrf.mxu0
  %v952 = vadd.f32 0.0, %v951
  %v953 = vpop.f32.mrf.mxu0
  %954 = vmatprep.mubr.f32.mxu0 0.0
  %955 = vmatmul.mubr.f32.gmra.mxu0 %v265
  %v956 = vpop.f32.mrf.mxu0
  %v957 = vadd.f32 0.0, %v956
  %v958 = vpop.f32.mrf.mxu0
  %959 = vmatprep.mubr.f32.mxu0 0.0
  %960 = vmatmul.mubr.f32.gmra.mxu0 %v268
  %v961 = vpop.f32.mrf.mxu0
  %v962 = vadd.f32 0.0, %v961
  %v963 = vpop.f32.mrf.mxu0
  %964 = vmatprep.mubr.f32.mxu0 0.0
  %965 = vmatmul.mubr.f32.gmra.mxu0 %v271
  %v966 = vpop.f32.mrf.mxu0
  %v967 = vadd.f32 0.0, %v966
  %v968 = vpop.f32.mrf.mxu0
  %969 = vmatprep.mubr.f32.mxu0 0.0
  %970 = vmatmul.mubr.f32.gmra.mxu0 %v274
  %v971 = vpop.f32.mrf.mxu0
  %v972 = vadd.f32 0.0, %v971
  %v973 = vpop.f32.mrf.mxu0
  %974 = vmatprep.mubr.f32.mxu0 0.0
  %975 = vmatmul.mubr.f32.gmra.mxu0 %v277
  %v976 = vpop.f32.mrf.mxu0
  %v977 = vadd.f32 0.0, %v976
  %v978 = vpop.f32.mrf.mxu0
  %979 = vmatprep.mubr.f32.mxu0 0.0
  %980 = vmatmul.mubr.f32.gmra.mxu0 %v280
  %v981 = vpop.f32.mrf.mxu0
  %v982 = vadd.f32 0.0, %v981
  %v983 = vpop.f32.mrf.mxu0
  %984 = vmatprep.mubr.f32.mxu0 0.0
  %985 = vmatmul.mubr.f32.gmra.mxu0 %v283
  %v986 = vpop.f32.mrf.mxu0
  %v987 = vadd.f32 0.0, %v986
  %v988 = vpop.f32.mrf.mxu0
  %989 = vmatprep.mubr.f32.mxu0 0.0
  %990 = vmatmul.mubr.f32.gmra.mxu0 %v286
  %v991 = vpop.f32.mrf.mxu0
  %v992 = vadd.f32 0.0, %v991
  %v993 = vpop.f32.mrf.mxu0
  %994 = vmatprep.mubr.f32.mxu0 0.0
  %995 = vmatmul.mubr.f32.gmra.mxu0 %v289
  %v996 = vpop.f32.mrf.mxu0
  %v997 = vadd.f32 0.0, %v996
  %v998 = vpop.f32.mrf.mxu0
  %999 = vmatprep.mubr.f32.mxu0 0.0
  %1000 = vmatmul.mubr.f32.gmra.mxu0 %v292
  %v1001 = vpop.f32.mrf.mxu0
  %v1002 = vadd.f32 0.0, %v1001
  %v1003 = vpop.f32.mrf.mxu0
  %1004 = vmatprep.mubr.f32.mxu0 0.0
  %1005 = vmatmul.mubr.f32.gmra.mxu0 %v295
  %v1006 = vpop.f32.mrf.mxu0
  %v1007 = vadd.f32 0.0, %v1006
  %v1008 = vpop.f32.mrf.mxu0
  %1009 = vmatprep.mubr.f32.mxu0 0.0
  %1010 = vmatmul.mubr.f32.gmra.mxu0 %v298
  %v1011 = vpop.f32.mrf.mxu0
  %v1012 = vadd.f32 0.0, %v1011
  %v1013 = vpop.f32.mrf.mxu0
  %1014 = vmatprep.mubr.f32.mxu0 0.0
  %1015 = vmatmul.mubr.f32.gmra.mxu0 %v301
  %v1016 = vpop.f32.mrf.mxu0
  %v1017 = vadd.f32 0.0, %v1016
  %v1018 = vpop.f32.mrf.mxu0
  %1019 = vmatprep.mubr.f32.mxu0 0.0
  %1020 = vmatmul.mubr.f32.gmra.mxu0 %v304
  %v1021 = vpop.f32.mrf.mxu0
  %v1022 = vadd.f32 0.0, %v1021
  %v1023 = vpop.f32.mrf.mxu0
  %1024 = vmatprep.mubr.f32.mxu0 0.0
  %1025 = vmatmul.mubr.f32.gmra.mxu0 %v307
  %v1026 = vpop.f32.mrf.mxu0
  %v1027 = vadd.f32 0.0, %v1026
  %v1028 = vpop.f32.mrf.mxu0
  %1029 = vmatprep.mubr.f32.mxu0 0.0
  %1030 = vmatmul.mubr.f32.gmra.mxu0 %v310
  %v1031 = vpop.f32.mrf.mxu0
  %v1032 = vadd.f32 0.0, %v1031
  %v1033 = vpop.f32.mrf.mxu0
  %1034 = vmatprep.mubr.f32.mxu0 0.0
  %1035 = vmatmul.mubr.f32.gmra.mxu0 %v313
  %v1036 = vpop.f32.mrf.mxu0
  %v1037 = vadd.f32 0.0, %v1036
  %v1038 = vpop.f32.mrf.mxu0
  %1039 = vmatprep.mubr.f32.mxu0 0.0
  %1040 = vmatmul.mubr.f32.gmra.mxu0 %v316
  %v1041 = vpop.f32.mrf.mxu0
  %v1042 = vadd.f32 0.0, %v1041
  %v1043 = vpop.f32.mrf.mxu0
  %1044 = vmatprep.mubr.f32.mxu0 0.0
  %1045 = vmatmul.mubr.f32.gmra.mxu0 %v319
  %v1046 = vpop.f32.mrf.mxu0
  %v1047 = vadd.f32 0.0, %v1046
  %v1048 = vpop.f32.mrf.mxu0
  %1049 = vmatprep.mubr.f32.mxu0 0.0
  %1050 = vmatmul.mubr.f32.gmra.mxu0 %v322
  %v1051 = vpop.f32.mrf.mxu0
  %v1052 = vadd.f32 0.0, %v1051
  %v1053 = vpop.f32.mrf.mxu0
  %1054 = vmatprep.mubr.f32.mxu0 0.0
  %1055 = vmatmul.mubr.f32.gmra.mxu0 %v325
  %v1056 = vpop.f32.mrf.mxu0
  %v1057 = vadd.f32 0.0, %v1056
  %v1058 = vpop.f32.mrf.mxu0
  %1059 = vmatprep.mubr.f32.mxu0 0.0
  %1060 = vmatmul.mubr.f32.gmra.mxu0 %v328
  %v1061 = vpop.f32.mrf.mxu0
  %v1062 = vadd.f32 0.0, %v1061
  %v1063 = vpop.f32.mrf.mxu0
  %1064 = vmatprep.mubr.f32.mxu0 0.0
  %1065 = vmatmul.mubr.f32.gmra.mxu0 %v331
  %v1066 = vpop.f32.mrf.mxu0
  %v1067 = vadd.f32 0.0, %v1066
  %v1068 = vpop.f32.mrf.mxu0
  %1069 = vmatprep.mubr.f32.mxu0 0.0
  %1070 = vmatmul.mubr.f32.gmra.mxu0 %v334
  %v1071 = vpop.f32.mrf.mxu0
  %v1072 = vadd.f32 0.0, %v1071
  %v1073 = vpop.f32.mrf.mxu0
  %1074 = vmatprep.mubr.f32.mxu0 0.0
  %1075 = vmatmul.mubr.f32.gmra.mxu0 %v337
  %v1076 = vpop.f32.mrf.mxu0
  %v1077 = vadd.f32 0.0, %v1076
  %v1078 = vpop.f32.mrf.mxu0
  %1079 = vmatprep.mubr.f32.mxu0 0.0
  %1080 = vmatmul.mubr.f32.gmra.mxu0 %v340
  %v1081 = vpop.f32.mrf.mxu0
  %v1082 = vadd.f32 0.0, %v1081
  %v1083 = vpop.f32.mrf.mxu0
  %1084 = vmatprep.mubr.f32.mxu0 0.0
  %1085 = vmatmul.mubr.f32.gmra.mxu0 %v343
  %v1086 = vpop.f32.mrf.mxu0
  %v1087 = vadd.f32 0.0, %v1086
  %v1088 = vpop.f32.mrf.mxu0
  %1089 = vmatprep.mubr.f32.mxu0 0.0
  %1090 = vmatmul.mubr.f32.gmra.mxu0 %v346
  %v1091 = vpop.f32.mrf.mxu0
  %v1092 = vadd.f32 0.0, %v1091
  %v1093 = vpop.f32.mrf.mxu0
  %1094 = vmatprep.mubr.f32.mxu0 0.0
  %1095 = vmatmul.mubr.f32.gmra.mxu0 %v349
  %v1096 = vpop.f32.mrf.mxu0
  %v1097 = vadd.f32 0.0, %v1096
  %v1098 = vpop.f32.mrf.mxu0
  %1099 = vmatprep.mubr.f32.mxu0 0.0
  %1100 = vmatmul.mubr.f32.gmra.mxu0 %v352
  %v1101 = vpop.f32.mrf.mxu0
  %v1102 = vadd.f32 0.0, %v1101
  %v1103 = vpop.f32.mrf.mxu0
  %1104 = vmatprep.mubr.f32.mxu0 0.0
  %1105 = vmatmul.mubr.f32.gmra.mxu0 %v355
  %v1106 = vpop.f32.mrf.mxu0
  %v1107 = vadd.f32 0.0, %v1106
  %v1108 = vpop.f32.mrf.mxu0
  %1109 = vmatprep.mubr.f32.mxu0 0.0
  %1110 = vmatmul.mubr.f32.gmra.mxu0 %v358
  %v1111 = vpop.f32.mrf.mxu0
  %v1112 = vadd.f32 0.0, %v1111
  %v1113 = vpop.f32.mrf.mxu0
  %1114 = vmatprep.mubr.f32.mxu0 0.0
  %1115 = vmatmul.mubr.f32.gmra.mxu0 %v361
  %v1116 = vpop.f32.mrf.mxu0
  %v1117 = vadd.f32 0.0, %v1116
  %v1118 = vpop.f32.mrf.mxu0
  %1119 = vmatprep.mubr.f32.mxu0 0.0
  %1120 = vmatmul.mubr.f32.gmra.mxu0 %v364
  %v1121 = vpop.f32.mrf.mxu0
  %v1122 = vadd.f32 0.0, %v1121
  %v1123 = vpop.f32.mrf.mxu0
  %1124 = vmatprep.mubr.f32.mxu0 0.0
  %1125 = vmatmul.mubr.f32.gmra.mxu0 %v367
  %v1126 = vpop.f32.mrf.mxu0
  %v1127 = vadd.f32 0.0, %v1126
  %v1128 = vpop.f32.mrf.mxu0
  %1129 = vmatprep.mubr.f32.mxu0 0.0
  %1130 = vmatmul.mubr.f32.gmra.mxu0 %v370
  %v1131 = vpop.f32.mrf.mxu0
  %v1132 = vadd.f32 0.0, %v1131
  %v1133 = vpop.f32.mrf.mxu0
  %1134 = vmatprep.mubr.f32.mxu0 0.0
  %1135 = vmatmul.mubr.f32.gmra.mxu0 %v373
  %v1136 = vpop.f32.mrf.mxu0
  %v1137 = vadd.f32 0.0, %v1136
  %v1138 = vpop.f32.mrf.mxu0
  %1139 = vmatprep.mubr.f32.mxu0 0.0
  %1140 = vmatmul.mubr.f32.gmra.mxu0 %v376
  %v1141 = vpop.f32.mrf.mxu0
  %v1142 = vadd.f32 0.0, %v1141
  %v1143 = vpop.f32.mrf.mxu0
  %1144 = vmatprep.mubr.f32.mxu0 0.0
  %1145 = vmatmul.mubr.f32.gmra.mxu0 %v379
  %v1146 = vpop.f32.mrf.mxu0
  %v1147 = vadd.f32 0.0, %v1146
  %v1148 = vpop.f32.mrf.mxu0
  %1149 = vmatprep.mubr.f32.mxu0 0.0
  %1150 = vmatmul.mubr.f32.gmra.mxu0 %v382
  %v1151 = vpop.f32.mrf.mxu0
  %v1152 = vadd.f32 0.0, %v1151
  %v1153 = vpop.f32.mrf.mxu0
  %1154 = vmatprep.mubr.f32.mxu0 0.0
  %1155 = vmatmul.mubr.f32.gmra.mxu0 %v385
  %v1156 = vpop.f32.mrf.mxu0
  %v1157 = vadd.f32 0.0, %v1156
  %v1158 = vpop.f32.mrf.mxu0
  %1159 = vmatprep.mubr.f32.mxu0 0.0
  %1160 = vmatmul.mubr.f32.gmra.mxu0 %v388
  %v1161 = vpop.f32.mrf.mxu0
  %v1162 = vadd.f32 0.0, %v1161
  %v1163 = vpop.f32.mrf.mxu0
  %1164 = vmatprep.mubr.f32.mxu0 0.0
  %1165 = vmatmul.mubr.f32.gmra.mxu0 %v391
  %v1166 = vpop.f32.mrf.mxu0
  %v1167 = vadd.f32 0.0, %v1166
  %v1168 = vpop.f32.mrf.mxu0
  %1169 = vmatprep.mubr.f32.mxu0 0.0
  %1170 = vmatmul.mubr.f32.gmra.mxu0 %v394
  %v1171 = vpop.f32.mrf.mxu0
  %v1172 = vadd.f32 0.0, %v1171
  %v1173 = vpop.f32.mrf.mxu0
  %1174 = vmatprep.mubr.f32.mxu0 0.0
  %1175 = vmatmul.mubr.f32.gmra.mxu0 %v397
  %v1176 = vpop.f32.mrf.mxu0
  %v1177 = vadd.f32 0.0, %v1176
  %v1178 = vpop.f32.mrf.mxu0
  %1179 = vmatprep.mubr.f32.mxu0 0.0
  %1180 = vmatmul.mubr.f32.gmra.mxu0 %v400
  %v1181 = vpop.f32.mrf.mxu0
  %v1182 = vadd.f32 0.0, %v1181
  %v1183 = vpop.f32.mrf.mxu0
  %1184 = vmatprep.mubr.f32.mxu0 0.0
  %1185 = vmatmul.mubr.f32.gmra.mxu0 %v403
  %v1186 = vpop.f32.mrf.mxu0
  %v1187 = vadd.f32 0.0, %v1186
  %v1188 = vpop.f32.mrf.mxu0
  %1189 = vmatprep.mubr.f32.mxu0 0.0
  %1190 = vmatmul.mubr.f32.gmra.mxu0 %v406
  %v1191 = vpop.f32.mrf.mxu0
  %v1192 = vadd.f32 0.0, %v1191
  %v1193 = vpop.f32.mrf.mxu0
  %1194 = vmatprep.mubr.f32.mxu0 0.0
  %1195 = vmatmul.mubr.f32.gmra.mxu0 %v409
  %v1196 = vpop.f32.mrf.mxu0
  %v1197 = vadd.f32 0.0, %v1196
  %v1198 = vpop.f32.mrf.mxu0
  %1199 = vmatprep.mubr.f32.mxu0 0.0
  %1200 = vmatmul.mubr.f32.gmra.mxu0 %v412
  %v1201 = vpop.f32.mrf.mxu0
  %v1202 = vadd.f32 0.0, %v1201
  %v1203 = vpop.f32.mrf.mxu0
  %1204 = vmatprep.mubr.f32.mxu0 0.0
  %1205 = vmatmul.mubr.f32.gmra.mxu0 %v415
  %v1206 = vpop.f32.mrf.mxu0
  %v1207 = vadd.f32 0.0, %v1206
  %v1208 = vpop.f32.mrf.mxu0
  %1209 = vmatprep.mubr.f32.mxu0 0.0
  %1210 = vmatmul.mubr.f32.gmra.mxu0 %v418
  %v1211 = vpop.f32.mrf.mxu0
  %v1212 = vadd.f32 0.0, %v1211
  %v1213 = vpop.f32.mrf.mxu0
  %1214 = vmatprep.mubr.f32.mxu0 0.0
  %1215 = vmatmul.mubr.f32.gmra.mxu0 %v421
  %v1216 = vpop.f32.mrf.mxu0
  %v1217 = vadd.f32 0.0, %v1216
  %v1218 = vpop.f32.mrf.mxu0
  %1219 = vmatprep.mubr.f32.mxu0 0.0
  %1220 = vmatmul.mubr.f32.gmra.mxu0 %v424
  %v1221 = vpop.f32.mrf.mxu0
  %v1222 = vadd.f32 0.0, %v1221
  %v1223 = vpop.f32.mrf.mxu0
  %1224 = vmatprep.mubr.f32.mxu0 0.0
  %1225 = vmatmul.mubr.f32.gmra.mxu0 %v427
  %v1226 = vpop.f32.mrf.mxu0
  %v1227 = vadd.f32 0.0, %v1226
  %v1228 = vpop.f32.mrf.mxu0
  %1229 = vmatprep.mubr.f32.mxu0 0.0
  %1230 = vmatmul.mubr.f32.gmra.mxu0 %v430
  %v1231 = vpop.f32.mrf.mxu0
  %v1232 = vadd.f32 0.0, %v1231
  %v1233 = vpop.f32.mrf.mxu0
  %1234 = vmatprep.mubr.f32.mxu0 0.0
  %1235 = vmatmul.mubr.f32.gmra.mxu0 %v433
  %v1236 = vpop.f32.mrf.mxu0
  %v1237 = vadd.f32 0.0, %v1236
  %v1238 = vpop.f32.mrf.mxu0
  %1239 = vmatprep.mubr.f32.mxu0 0.0
  %1240 = vmatmul.mubr.f32.gmra.mxu0 %v436
  %v1241 = vpop.f32.mrf.mxu0
  %v1242 = vadd.f32 0.0, %v1241
  %v1243 = vpop.f32.mrf.mxu0
  %1244 = vmatprep.mubr.f32.mxu0 0.0
  %1245 = vmatmul.mubr.f32.gmra.mxu0 %v439
  %v1246 = vpop.f32.mrf.mxu0
  %v1247 = vadd.f32 0.0, %v1246
  %v1248 = vpop.f32.mrf.mxu0
  %1249 = vmatprep.mubr.f32.mxu0 0.0
  %1250 = vmatmul.mubr.f32.gmra.mxu0 %v442
  %v1251 = vpop.f32.mrf.mxu0
  %v1252 = vadd.f32 0.0, %v1251
  %v1253 = vpop.f32.mrf.mxu0
  %1254 = vmatprep.mubr.f32.mxu0 0.0
  %1255 = vmatmul.mubr.f32.gmra.mxu0 %v445
  %v1256 = vpop.f32.mrf.mxu0
  %v1257 = vadd.f32 0.0, %v1256
  %v1258 = vpop.f32.mrf.mxu0
  %1259 = vmatprep.mubr.f32.mxu0 0.0
  %1260 = vmatmul.mubr.f32.gmra.mxu0 %v448
  %v1261 = vpop.f32.mrf.mxu0
  %v1262 = vadd.f32 0.0, %v1261
  %v1263 = vpop.f32.mrf.mxu0
  %1264 = vmatprep.mubr.f32.mxu0 0.0
  %1265 = vmatmul.mubr.f32.gmra.mxu0 %v451
  %v1266 = vpop.f32.mrf.mxu0
  %v1267 = vadd.f32 0.0, %v1266
  %v1268 = vpop.f32.mrf.mxu0
  %1269 = vmatprep.mubr.f32.mxu0 0.0
  %1270 = vmatmul.mubr.f32.gmra.mxu0 %v454
  %v1271 = vpop.f32.mrf.mxu0
  %v1272 = vadd.f32 0.0, %v1271
  %v1273 = vpop.f32.mrf.mxu0
  %1274 = vmatprep.mubr.f32.mxu0 0.0
  %1275 = vmatmul.mubr.f32.gmra.mxu0 %v457
  %v1276 = vpop.f32.mrf.mxu0
  %v1277 = vadd.f32 0.0, %v1276
  %v1278 = vpop.f32.mrf.mxu0
  %1279 = vmatprep.mubr.f32.mxu0 0.0
  %1280 = vmatmul.mubr.f32.gmra.mxu0 %v460
  %v1281 = vpop.f32.mrf.mxu0
  %v1282 = vadd.f32 0.0, %v1281
  %v1283 = vpop.f32.mrf.mxu0
  %1284 = vmatprep.mubr.f32.mxu0 0.0
  %1285 = vmatmul.mubr.f32.gmra.mxu0 %v463
  %v1286 = vpop.f32.mrf.mxu0
  %v1287 = vadd.f32 0.0, %v1286
  %v1288 = vpop.f32.mrf.mxu0
  %1289 = vmatprep.mubr.f32.mxu0 0.0
  %1290 = vmatmul.mubr.f32.gmra.mxu0 %v466
  %v1291 = vpop.f32.mrf.mxu0
  %v1292 = vadd.f32 0.0, %v1291
  %v1293 = vpop.f32.mrf.mxu0
  %1294 = vmatprep.mubr.f32.mxu0 0.0
  %1295 = vmatmul.mubr.f32.gmra.mxu0 %v469
  %v1296 = vpop.f32.mrf.mxu0
  %v1297 = vadd.f32 0.0, %v1296
  %v1298 = vpop.f32.mrf.mxu0
  %1299 = vmatprep.mubr.f32.mxu0 0.0
  %1300 = vmatmul.mubr.f32.gmra.mxu0 %v472
  %v1301 = vpop.f32.mrf.mxu0
  %v1302 = vadd.f32 0.0, %v1301
  %v1303 = vpop.f32.mrf.mxu0
  %1304 = vmatprep.mubr.f32.mxu0 0.0
  %1305 = vmatmul.mubr.f32.gmra.mxu0 %v475
  %v1306 = vpop.f32.mrf.mxu0
  %v1307 = vadd.f32 0.0, %v1306
  %v1308 = vpop.f32.mrf.mxu0
  %1309 = vmatprep.mubr.f32.mxu0 0.0
  %1310 = vmatmul.mubr.f32.gmra.mxu0 %v478
  %v1311 = vpop.f32.mrf.mxu0
  %v1312 = vadd.f32 0.0, %v1311
  %v1313 = vpop.f32.mrf.mxu0
  %1314 = vmatprep.mubr.f32.mxu0 0.0
  %1315 = vmatmul.mubr.f32.gmra.mxu0 %v481
  %v1316 = vpop.f32.mrf.mxu0
  %v1317 = vadd.f32 0.0, %v1316
  %v1318 = vpop.f32.mrf.mxu0
  %1319 = vmatprep.mubr.f32.mxu0 0.0
  %1320 = vmatmul.mubr.f32.gmra.mxu0 %v484
  %v1321 = vpop.f32.mrf.mxu0
  %v1322 = vadd.f32 0.0, %v1321
  %v1323 = vpop.f32.mrf.mxu0
  %1324 = vmatprep.mubr.f32.mxu0 0.0
  %1325 = vmatmul.mubr.f32.gmra.mxu0 %v487
  %v1326 = vpop.f32.mrf.mxu0
  %v1327 = vadd.f32 0.0, %v1326
  %v1328 = vpop.f32.mrf.mxu0
  %1329 = vmatprep.mubr.f32.mxu0 0.0
  %1330 = vmatmul.mubr.f32.gmra.mxu0 %v490
  %v1331 = vpop.f32.mrf.mxu0
  %v1332 = vadd.f32 0.0, %v1331
  %v1333 = vpop.f32.mrf.mxu0
  %1334 = vmatprep.mubr.f32.mxu0 0.0
  %1335 = vmatmul.mubr.f32.gmra.mxu0 %v493
  %v1336 = vpop.f32.mrf.mxu0
  %v1337 = vadd.f32 0.0, %v1336
  %v1338 = vpop.f32.mrf.mxu0
  %1339 = vmatprep.mubr.f32.mxu0 0.0
  %1340 = vmatmul.mubr.f32.gmra.mxu0 %v496
  %v1341 = vpop.f32.mrf.mxu0
  %v1342 = vadd.f32 0.0, %v1341
  %v1343 = vpop.f32.mrf.mxu0
  %1344 = vmatprep.mubr.f32.mxu0 0.0
  %1345 = vmatmul.mubr.f32.gmra.mxu0 %v499
  %v1346 = vpop.f32.mrf.mxu0
  %v1347 = vadd.f32 0.0, %v1346
  %v1348 = vpop.f32.mrf.mxu0
  %1349 = vmatprep.mubr.f32.mxu0 0.0
  %1350 = vmatmul.mubr.f32.gmra.mxu0 %v502
  %v1351 = vpop.f32.mrf.mxu0
  %v1352 = vadd.f32 0.0, %v1351
  %v1353 = vpop.f32.mrf.mxu0
  %1354 = vmatprep.mubr.f32.mxu0 0.0
  %1355 = vmatmul.mubr.f32.gmra.mxu0 %v505
  %v1356 = vpop.f32.mrf.mxu0
  %v1357 = vadd.f32 0.0, %v1356
  %v1358 = vpop.f32.mrf.mxu0
  %1359 = vmatprep.mubr.f32.mxu0 0.0
  %1360 = vmatmul.mubr.f32.gmra.mxu0 %v508
  %v1361 = vpop.f32.mrf.mxu0
  %v1362 = vadd.f32 0.0, %v1361
  %v1363 = vpop.f32.mrf.mxu0
  %1364 = vmatprep.mubr.f32.mxu0 0.0
  %1365 = vmatmul.mubr.f32.gmra.mxu0 %v511
  %v1366 = vpop.f32.mrf.mxu0
  %v1367 = vadd.f32 0.0, %v1366
  %v1368 = vpop.f32.mrf.mxu0
  %1369 = vmatprep.mubr.f32.mxu0 0.0
  %1370 = vmatmul.mubr.f32.gmra.mxu0 %v514
  %v1371 = vpop.f32.mrf.mxu0
  %v1372 = vadd.f32 0.0, %v1371
  %v1373 = vpop.f32.mrf.mxu0
  %1374 = vmatprep.mubr.f32.mxu0 0.0
  %1375 = vmatmul.mubr.f32.gmra.mxu0 %v517
  %v1376 = vpop.f32.mrf.mxu0
  %v1377 = vadd.f32 0.0, %v1376
  %v1378 = vpop.f32.mrf.mxu0
  %1379 = vmatprep.mubr.f32.mxu0 0.0
  %1380 = vmatmul.mubr.f32.gmra.mxu0 %v520
  %v1381 = vpop.f32.mrf.mxu0
  %v1382 = vadd.f32 0.0, %v1381
  %v1383 = vpop.f32.mrf.mxu0
  %1384 = vmatprep.mubr.f32.mxu0 0.0
  %1385 = vmatmul.mubr.f32.gmra.mxu0 %v523
  %v1386 = vpop.f32.mrf.mxu0
  %v1387 = vadd.f32 0.0, %v1386
  %v1388 = vpop.f32.mrf.mxu0
  %1389 = vmatprep.mubr.f32.mxu0 0.0
  %1390 = vmatmul.mubr.f32.gmra.mxu0 %v526
  %v1391 = vpop.f32.mrf.mxu0
  %v1392 = vadd.f32 0.0, %v1391
  %v1393 = vpop.f32.mrf.mxu0
  %1394 = vmatprep.mubr.f32.mxu0 0.0
  %1395 = vmatmul.mubr.f32.gmra.mxu0 %v529
  %v1396 = vpop.f32.mrf.mxu0
  %v1397 = vadd.f32 0.0, %v1396
  %v1398 = vpop.f32.mrf.mxu0
  %1399 = vmatprep.mubr.f32.mxu0 0.0
  %1400 = vmatmul.mubr.f32.gmra.mxu0 %v532
  %v1401 = vpop.f32.mrf.mxu0
  %v1402 = vadd.f32 0.0, %v1401
  %v1403 = vpop.f32.mrf.mxu0
  %1404 = vmatprep.mubr.f32.mxu0 0.0
  %1405 = vmatmul.mubr.f32.gmra.mxu0 %v535
  %v1406 = vpop.f32.mrf.mxu0
  %v1407 = vadd.f32 0.0, %v1406
  %v1408 = vpop.f32.mrf.mxu0
  %1409 = vmatprep.mubr.f32.mxu0 0.0
  %1410 = vmatmul.mubr.f32.gmra.mxu0 %v538
  %v1411 = vpop.f32.mrf.mxu0
  %v1412 = vadd.f32 0.0, %v1411
  %v1413 = vpop.f32.mrf.mxu0
  %1414 = vmatprep.mubr.f32.mxu0 0.0
  %1415 = vmatmul.mubr.f32.gmra.mxu0 %v541
  %v1416 = vpop.f32.mrf.mxu0
  %v1417 = vadd.f32 0.0, %v1416
  %v1418 = vpop.f32.mrf.mxu0
  %1419 = vmatprep.mubr.f32.mxu0 0.0
  %1420 = vmatmul.mubr.f32.gmra.mxu0 %v544
  %v1421 = vpop.f32.mrf.mxu0
  %v1422 = vadd.f32 0.0, %v1421
  %v1423 = vpop.f32.mrf.mxu0
  %1424 = vmatprep.mubr.f32.mxu0 0.0
  %1425 = vmatmul.mubr.f32.gmra.mxu0 %v547
  %v1426 = vpop.f32.mrf.mxu0
  %v1427 = vadd.f32 0.0, %v1426
  %v1428 = vpop.f32.mrf.mxu0
  %1429 = vmatprep.mubr.f32.mxu0 0.0
  %1430 = vmatmul.mubr.f32.gmra.mxu0 %v550
  %v1431 = vpop.f32.mrf.mxu0
  %v1432 = vadd.f32 0.0, %v1431
  %v1433 = vpop.f32.mrf.mxu0
  %1434 = vmatprep.mubr.f32.mxu0 0.0
  %1435 = vmatmul.mubr.f32.gmra.mxu0 %v553
  %v1436 = vpop.f32.mrf.mxu0
  %v1437 = vadd.f32 0.0, %v1436
  %v1438 = vpop.f32.mrf.mxu0
  %1439 = vmatprep.mubr.f32.mxu0 0.0
  %1440 = vmatmul.mubr.f32.gmra.mxu0 %v556
  %v1441 = vpop.f32.mrf.mxu0
  %v1442 = vadd.f32 0.0, %v1441
  %v1443 = vpop.f32.mrf.mxu0
  %1444 = vmatprep.mubr.f32.mxu0 0.0
  %1445 = vmatmul.mubr.f32.gmra.mxu0 %v559
  %v1446 = vpop.f32.mrf.mxu0
  %v1447 = vadd.f32 0.0, %v1446
  %v1448 = vpop.f32.mrf.mxu0
  %1449 = vmatprep.mubr.f32.mxu0 0.0
  %1450 = vmatmul.mubr.f32.gmra.mxu0 %v562
  %v1451 = vpop.f32.mrf.mxu0
  %v1452 = vadd.f32 0.0, %v1451
  %v1453 = vpop.f32.mrf.mxu0
  %1454 = vmatprep.mubr.f32.mxu0 0.0
  %1455 = vmatmul.mubr.f32.gmra.mxu0 %v565
  %v1456 = vpop.f32.mrf.mxu0
  %v1457 = vadd.f32 0.0, %v1456
  %v1458 = vpop.f32.mrf.mxu0
  %1459 = vmatprep.mubr.f32.mxu0 0.0
  %1460 = vmatmul.mubr.f32.gmra.mxu0 %v568
  %v1461 = vpop.f32.mrf.mxu0
  %v1462 = vadd.f32 0.0, %v1461
  %v1463 = vpop.f32.mrf.mxu0
  %1464 = vmatprep.mubr.f32.mxu0 0.0
  %1465 = vmatmul.mubr.f32.gmra.mxu0 %v571
  %v1466 = vpop.f32.mrf.mxu0
  %v1467 = vadd.f32 0.0, %v1466
  %v1468 = vpop.f32.mrf.mxu0
  %1469 = vmatprep.mubr.f32.mxu0 0.0
  %1470 = vmatmul.mubr.f32.gmra.mxu0 %v574
  %v1471 = vpop.f32.mrf.mxu0
  %v1472 = vadd.f32 0.0, %v1471
  %v1473 = vpop.f32.mrf.mxu0
  %1474 = vmatprep.mubr.f32.mxu0 0.0
  %1475 = vmatmul.mubr.f32.gmra.mxu0 %v577
  %v1476 = vpop.f32.mrf.mxu0
  %v1477 = vadd.f32 0.0, %v1476
  %v1478 = vpop.f32.mrf.mxu0
  %1479 = vmatprep.mubr.f32.mxu0 0.0
  %1480 = vmatmul.mubr.f32.gmra.mxu0 %v580
  %v1481 = vpop.f32.mrf.mxu0
  %v1482 = vadd.f32 0.0, %v1481
  %v1483 = vpop.f32.mrf.mxu0
  %1484 = vmatprep.mubr.f32.mxu0 0.0
  %1485 = vmatmul.mubr.f32.gmra.mxu0 %v583
  %v1486 = vpop.f32.mrf.mxu0
  %v1487 = vadd.f32 0.0, %v1486
  %v1488 = vpop.f32.mrf.mxu0
  %1489 = vmatprep.mubr.f32.mxu0 0.0
  %1490 = vmatmul.mubr.f32.gmra.mxu0 %v586
  %v1491 = vpop.f32.mrf.mxu0
  %v1492 = vadd.f32 0.0, %v1491
  %v1493 = vpop.f32.mrf.mxu0
  %1494 = vmatprep.mubr.f32.mxu0 0.0
  %1495 = vmatmul.mubr.f32.gmra.mxu0 %v589
  %v1496 = vpop.f32.mrf.mxu0
  %v1497 = vadd.f32 0.0, %v1496
  %v1498 = vpop.f32.mrf.mxu0
  %1499 = vmatprep.mubr.f32.mxu0 0.0
  %1500 = vmatmul.mubr.f32.gmra.mxu0 %v592
  %v1501 = vpop.f32.mrf.mxu0
  %v1502 = vadd.f32 0.0, %v1501
  %v1503 = vpop.f32.mrf.mxu0
  %1504 = vmatprep.mubr.f32.mxu0 0.0
  %1505 = vmatmul.mubr.f32.gmra.mxu0 %v595
  %v1506 = vpop.f32.mrf.mxu0
  %v1507 = vadd.f32 0.0, %v1506
  %v1508 = vpop.f32.mrf.mxu0
  %1509 = vmatprep.mubr.f32.mxu0 0.0
  %1510 = vmatmul.mubr.f32.gmra.mxu0 %v598
  %v1511 = vpop.f32.mrf.mxu0
  %v1512 = vadd.f32 0.0, %v1511
  %v1513 = vpop.f32.mrf.mxu0
  %1514 = vmatprep.mubr.f32.mxu0 0.0
  %1515 = vmatmul.mubr.f32.gmra.mxu0 %v601
  %v1516 = vpop.f32.mrf.mxu0
  %v1517 = vadd.f32 0.0, %v1516
  %v1518 = vpop.f32.mrf.mxu0
  %1519 = vmatprep.mubr.f32.mxu0 0.0
  %1520 = vmatmul.mubr.f32.gmra.mxu0 %v604
  %v1521 = vpop.f32.mrf.mxu0
  %v1522 = vadd.f32 0.0, %v1521
  %v1523 = vpop.f32.mrf.mxu0
  %1524 = vmatprep.mubr.f32.mxu0 0.0
  %1525 = vmatmul.mubr.f32.gmra.mxu0 %v607
  %v1526 = vpop.f32.mrf.mxu0
  %v1527 = vadd.f32 0.0, %v1526
  %v1528 = vpop.f32.mrf.mxu0
  %1529 = vmatprep.mubr.f32.mxu0 0.0
  %1530 = vmatmul.mubr.f32.gmra.mxu0 %v610
  %v1531 = vpop.f32.mrf.mxu0
  %v1532 = vadd.f32 0.0, %v1531
  %v1533 = vpop.f32.mrf.mxu0
  %1534 = vmatprep.mubr.f32.mxu0 0.0
  %1535 = vmatmul.mubr.f32.gmra.mxu0 %v613
  %v1536 = vpop.f32.mrf.mxu0
  %v1537 = vadd.f32 0.0, %v1536
  %v1538 = vpop.f32.mrf.mxu0
  %1539 = vmatprep.mubr.f32.mxu0 0.0
  %1540 = vmatmul.mubr.f32.gmra.mxu0 %v616
  %v1541 = vpop.f32.mrf.mxu0
  %v1542 = vadd.f32 0.0, %v1541
  %v1543 = vpop.f32.mrf.mxu0
  %1544 = vmatprep.mubr.f32.mxu0 0.0
  %1545 = vmatmul.mubr.f32.gmra.mxu0 %v619
  %v1546 = vpop.f32.mrf.mxu0
  %v1547 = vadd.f32 0.0, %v1546
  %v1548 = vpop.f32.mrf.mxu0
  %1549 = vmatprep.mubr.f32.mxu0 0.0
  %1550 = vmatmul.mubr.f32.gmra.mxu0 %v622
  %v1551 = vpop.f32.mrf.mxu0
  %v1552 = vadd.f32 0.0, %v1551
  %v1553 = vpop.f32.mrf.mxu0
  %1554 = vmatprep.mubr.f32.mxu0 0.0
  %1555 = vmatmul.mubr.f32.gmra.mxu0 %v625
  %v1556 = vpop.f32.mrf.mxu0
  %v1557 = vadd.f32 0.0, %v1556
  %v1558 = vpop.f32.mrf.mxu0
  %1559 = vmatprep.mubr.f32.mxu0 0.0
  %1560 = vmatmul.mubr.f32.gmra.mxu0 %v628
  %v1561 = vpop.f32.mrf.mxu0
  %v1562 = vadd.f32 0.0, %v1561
  %v1563 = vpop.f32.mrf.mxu0
  %1564 = vmatprep.mubr.f32.mxu0 0.0
  %1565 = vmatmul.mubr.f32.gmra.mxu0 %v631
  %v1566 = vpop.f32.mrf.mxu0
  %v1567 = vadd.f32 0.0, %v1566
  %v1568 = vpop.f32.mrf.mxu0
  %1569 = vmatprep.mubr.f32.mxu0 0.0
  %1570 = vmatmul.mubr.f32.gmra.mxu0 %v634
  %v1571 = vpop.f32.mrf.mxu0
  %v1572 = vadd.f32 0.0, %v1571
  %v1573 = vpop.f32.mrf.mxu0
  %1574 = vmatprep.mubr.f32.mxu0 0.0
  %1575 = vmatmul.mubr.f32.gmra.mxu0 %v637
  %v1576 = vpop.f32.mrf.mxu0
  %v1577 = vadd.f32 0.0, %v1576
  %v1578 = vpop.f32.mrf.mxu0
  %1579 = vmatprep.mubr.f32.mxu0 0.0
  %1580 = vmatmul.mubr.f32.gmra.mxu0 %v640
  %v1581 = vpop.f32.mrf.mxu0
  %v1582 = vadd.f32 0.0, %v1581
  %v1583 = vpop.f32.mrf.mxu0
  %1584 = vmatprep.mubr.f32.mxu0 0.0
  %1585 = vmatmul.mubr.f32.gmra.mxu0 %v643
  %v1586 = vpop.f32.mrf.mxu0
  %v1587 = vadd.f32 0.0, %v1586
  %v1588 = vpop.f32.mrf.mxu0
  %1589 = vmatprep.mubr.f32.mxu0 0.0
  %1590 = vmatmul.mubr.f32.gmra.mxu0 %v646
  %v1591 = vpop.f32.mrf.mxu0
  %v1592 = vadd.f32 0.0, %v1591
  %v1593 = vpop.f32.mrf.mxu0
  %1594 = vmatprep.mubr.f32.mxu0 0.0
  %1595 = vmatmul.mubr.f32.gmra.mxu0 %v649
  %v1596 = vpop.f32.mrf.mxu0
  %v1597 = vadd.f32 0.0, %v1596
  %v1598 = vpop.f32.mrf.mxu0
  %1599 = vmatprep.mubr.f32.mxu0 0.0
  %1600 = vmatmul.mubr.f32.gmra.mxu0 %v652
  %v1601 = vpop.f32.mrf.mxu0
  %v1602 = vadd.f32 0.0, %v1601
  %v1603 = vpop.f32.mrf.mxu0
  %1604 = vmatprep.mubr.f32.mxu0 0.0
  %1605 = vmatmul.mubr.f32.gmra.mxu0 %v655
  %v1606 = vpop.f32.mrf.mxu0
  %v1607 = vadd.f32 0.0, %v1606
  %v1608 = vpop.f32.mrf.mxu0
  %1609 = vmatprep.mubr.f32.mxu0 0.0
  %1610 = vmatmul.mubr.f32.gmra.mxu0 %v658
  %v1611 = vpop.f32.mrf.mxu0
  %v1612 = vadd.f32 0.0, %v1611
  %v1613 = vpop.f32.mrf.mxu0
  %1614 = vmatprep.mubr.f32.mxu0 0.0
  %1615 = vmatmul.mubr.f32.gmra.mxu0 %v661
  %v1616 = vpop.f32.mrf.mxu0
  %v1617 = vadd.f32 0.0, %v1616
  %v1618 = vpop.f32.mrf.mxu0
  %1619 = vmatprep.mubr.f32.mxu0 0.0
  %1620 = vmatmul.mubr.f32.gmra.mxu0 %v664
  %v1621 = vpop.f32.mrf.mxu0
  %v1622 = vadd.f32 0.0, %v1621
  %v1623 = vpop.f32.mrf.mxu0
  %1624 = vmatprep.mubr.f32.mxu0 0.0
  %1625 = vmatmul.mubr.f32.gmra.mxu0 %v667
  %v1626 = vpop.f32.mrf.mxu0
  %v1627 = vadd.f32 0.0, %v1626
  %v1628 = vpop.f32.mrf.mxu0
  %1629 = vmatprep.mubr.f32.mxu0 0.0
  %1630 = vmatmul.mubr.f32.gmra.mxu0 %v670
  %v1631 = vpop.f32.mrf.mxu0
  %v1632 = vadd.f32 0.0, %v1631
  %v1633 = vpop.f32.mrf.mxu0
  %1634 = vmatprep.mubr.f32.mxu0 0.0
  %1635 = vmatmul.mubr.f32.gmra.mxu0 %v673
  %v1636 = vpop.f32.mrf.mxu0
  %v1637 = vadd.f32 0.0, %v1636
  %v1638 = vpop.f32.mrf.mxu0
  %1639 = vmatprep.mubr.f32.mxu0 0.0
  %1640 = vmatmul.mubr.f32.gmra.mxu0 %v676
  %v1641 = vpop.f32.mrf.mxu0
  %v1642 = vadd.f32 0.0, %v1641
  %v1643 = vpop.f32.mrf.mxu0
  %1644 = vmatprep.mubr.f32.mxu0 0.0
  %1645 = vmatmul.mubr.f32.gmra.mxu0 %v679
  %v1646 = vpop.f32.mrf.mxu0
  %v1647 = vadd.f32 0.0, %v1646
  %v1648 = vpop.f32.mrf.mxu0
  %1649 = vmatprep.mubr.f32.mxu0 0.0
  %1650 = vmatmul.mubr.f32.gmra.mxu0 %v682
  %v1651 = vpop.f32.mrf.mxu0
  %v1652 = vadd.f32 0.0, %v1651
  %v1653 = vpop.f32.mrf.mxu0
  %1654 = vmatprep.mubr.f32.mxu0 0.0
  %1655 = vmatmul.mubr.f32.gmra.mxu0 %v685
  %v1656 = vpop.f32.mrf.mxu0
  %v1657 = vadd.f32 0.0, %v1656
  %v1658 = vpop.f32.mrf.mxu0
  %1659 = vmatprep.mubr.f32.mxu0 0.0
  %1660 = vmatmul.mubr.f32.gmra.mxu0 %v688
  %v1661 = vpop.f32.mrf.mxu0
  %v1662 = vadd.f32 0.0, %v1661
  %v1663 = vpop.f32.mrf.mxu0
  %1664 = vmatprep.mubr.f32.mxu0 0.0
  %1665 = vmatmul.mubr.f32.gmra.mxu0 %v691
  %v1666 = vpop.f32.mrf.mxu0
  %v1667 = vadd.f32 0.0, %v1666
  %v1668 = vpop.f32.mrf.mxu0
  %1669 = vmatprep.mubr.f32.mxu0 0.0
  %1670 = vmatmul.mubr.f32.gmra.mxu0 %v694
  %v1671 = vpop.f32.mrf.mxu0
  %v1672 = vadd.f32 0.0, %v1671
  %v1673 = vpop.f32.mrf.mxu0
  %1674 = vmatprep.mubr.f32.mxu0 0.0
  %1675 = vmatmul.mubr.f32.gmra.mxu0 %v697
  %v1676 = vpop.f32.mrf.mxu0
  %v1677 = vadd.f32 0.0, %v1676
  %v1678 = vpop.f32.mrf.mxu0
  %1679 = vmatprep.mubr.f32.mxu0 0.0
  %1680 = vmatmul.mubr.f32.gmra.mxu0 %v700
  %v1681 = vpop.f32.mrf.mxu0
  %v1682 = vadd.f32 0.0, %v1681
  %v1683 = vpop.f32.mrf.mxu0
  %1684 = vmatprep.mubr.f32.mxu0 0.0
  %1685 = vmatmul.mubr.f32.gmra.mxu0 %v703
  %v1686 = vpop.f32.mrf.mxu0
  %v1687 = vadd.f32 0.0, %v1686
  %v1688 = vpop.f32.mrf.mxu0
  %1689 = vmatprep.mubr.f32.mxu0 0.0
  %1690 = vmatmul.mubr.f32.gmra.mxu0 %v706
  %v1691 = vpop.f32.mrf.mxu0
  %v1692 = vadd.f32 0.0, %v1691
  %v1693 = vpop.f32.mrf.mxu0
  %1694 = vmatprep.mubr.f32.mxu0 0.0
  %1695 = vmatmul.mubr.f32.gmra.mxu0 %v709
  %v1696 = vpop.f32.mrf.mxu0
  %v1697 = vadd.f32 0.0, %v1696
  %v1698 = vpop.f32.mrf.mxu0
  %1699 = vmatprep.mubr.f32.mxu0 0.0
  %1700 = vmatmul.mubr.f32.gmra.mxu0 %v712
  %v1701 = vpop.f32.mrf.mxu0
  %v1702 = vadd.f32 0.0, %v1701
  %v1703 = vpop.f32.mrf.mxu0
  %1704 = vmatprep.mubr.f32.mxu0 0.0
  %1705 = vmatmul.mubr.f32.gmra.mxu0 %v715
  %v1706 = vpop.f32.mrf.mxu0
  %v1707 = vadd.f32 0.0, %v1706
  %v1708 = vpop.f32.mrf.mxu0
  %1709 = vmatprep.mubr.f32.mxu0 0.0
  %1710 = vmatmul.mubr.f32.gmra.mxu0 %v718
  %v1711 = vpop.f32.mrf.mxu0
  %v1712 = vadd.f32 0.0, %v1711
  %v1713 = vpop.f32.mrf.mxu0
  %1714 = vmatprep.mubr.f32.mxu0 0.0
  %1715 = vmatmul.mubr.f32.gmra.mxu0 %v721
  %v1716 = vpop.f32.mrf.mxu0
  %v1717 = vadd.f32 0.0, %v1716
  %v1718 = vpop.f32.mrf.mxu0
  %1719 = vmatprep.mubr.f32.mxu0 0.0
  %1720 = vmatmul.mubr.f32.gmra.mxu0 %v724
  %v1721 = vpop.f32.mrf.mxu0
  %v1722 = vadd.f32 0.0, %v1721
  %v1723 = vpop.f32.mrf.mxu0
  %1724 = vmatprep.mubr.f32.mxu0 0.0
  %1725 = vmatmul.mubr.f32.gmra.mxu0 %v727
  %v1726 = vpop.f32.mrf.mxu0
  %v1727 = vadd.f32 0.0, %v1726
  %v1728 = vpop.f32.mrf.mxu0
  %1729 = vmatprep.mubr.f32.mxu0 0.0
  %1730 = vmatmul.mubr.f32.gmra.mxu0 %v730
  %v1731 = vpop.f32.mrf.mxu0
  %v1732 = vadd.f32 0.0, %v1731
  %v1733 = vpop.f32.mrf.mxu0
  %1734 = vmatprep.mubr.f32.mxu0 0.0
  %1735 = vmatmul.mubr.f32.gmra.mxu0 %v733
  %v1736 = vpop.f32.mrf.mxu0
  %v1737 = vadd.f32 0.0, %v1736
  %v1738 = vpop.f32.mrf.mxu0
  %1739 = vmatprep.mubr.f32.mxu0 0.0
  %1740 = vmatmul.mubr.f32.gmra.mxu0 %v736
  %v1741 = vpop.f32.mrf.mxu0
  %v1742 = vadd.f32 0.0, %v1741
  %v1743 = vpop.f32.mrf.mxu0
  %1744 = vmatprep.mubr.f32.mxu0 0.0
  %1745 = vmatmul.mubr.f32.gmra.mxu0 %v739
  %v1746 = vpop.f32.mrf.mxu0
  %v1747 = vadd.f32 0.0, %v1746
  %v1748 = vpop.f32.mrf.mxu0
  %1749 = vmatprep.mubr.f32.mxu0 0.0
  %1750 = vmatmul.mubr.f32.gmra.mxu0 %v742
  %v1751 = vpop.f32.mrf.mxu0
  %v1752 = vadd.f32 0.0, %v1751
  %v1753 = vpop.f32.mrf.mxu0
  %1754 = vmatprep.mubr.f32.mxu0 0.0
  %1755 = vmatmul.mubr.f32.gmra.mxu0 %v745
  %v1756 = vpop.f32.mrf.mxu0
  %v1757 = vadd.f32 0.0, %v1756
  %v1758 = vpop.f32.mrf.mxu0
  %1759 = vmatprep.mubr.f32.mxu0 0.0
  %1760 = vmatmul.mubr.f32.gmra.mxu0 %v748
  %v1761 = vpop.f32.mrf.mxu0
  %v1762 = vadd.f32 0.0, %v1761
  %v1763 = vpop.f32.mrf.mxu0
  %1764 = vmatprep.mubr.f32.mxu0 0.0
  %1765 = vmatmul.mubr.f32.gmra.mxu0 %v751
  %v1766 = vpop.f32.mrf.mxu0
  %v1767 = vadd.f32 0.0, %v1766
  %v1768 = vpop.f32.mrf.mxu0
  %1769 = vmatprep.mubr.f32.mxu0 0.0
  %1770 = vmatmul.mubr.f32.gmra.mxu0 %v754
  %v1771 = vpop.f32.mrf.mxu0
  %v1772 = vadd.f32 0.0, %v1771
  %v1773 = vpop.f32.mrf.mxu0
  %1774 = vmatprep.mubr.f32.mxu0 0.0
  %1775 = vmatmul.mubr.f32.gmra.mxu0 %v757
  %v1776 = vpop.f32.mrf.mxu0
  %v1777 = vadd.f32 0.0, %v1776
  %v1778 = vpop.f32.mrf.mxu0
  %1779 = vmatprep.mubr.f32.mxu0 0.0
  %1780 = vmatmul.mubr.f32.gmra.mxu0 %v760
  %v1781 = vpop.f32.mrf.mxu0
  %v1782 = vadd.f32 0.0, %v1781
  %v1783 = vpop.f32.mrf.mxu0
  %1784 = vmatprep.mubr.f32.mxu0 0.0
  %1785 = vmatmul.mubr.f32.gmra.mxu0 %v763
  %v1786 = vpop.f32.mrf.mxu0
  %v1787 = vadd.f32 0.0, %v1786
  %v1788 = vpop.f32.mrf.mxu0
  %1789 = vmatprep.mubr.f32.mxu0 0.0
  %1790 = vmatmul.mubr.f32.gmra.mxu0 %v766
  %v1791 = vpop.f32.mrf.mxu0
  %v1792 = vadd.f32 0.0, %v1791
  %v1793 = vpop.f32.mrf.mxu0
  %1794 = vmatprep.mubr.f32.mxu0 0.0
  %1795 = vmatmul.mubr.f32.gmra.mxu0 %v769
  %v1796 = vpop.f32.mrf.mxu0
  %v1797 = vadd.f32 0.0, %v1796
  %v1798 = vpop.f32.mrf.mxu0
  %1799 = vmatprep.mubr.f32.mxu0 0.0
  %1800 = vmatmul.mubr.f32.gmra.mxu0 %v772
  %v1801 = vpop.f32.mrf.mxu0
  %v1802 = vadd.f32 0.0, %v1801
  %v1803 = vpop.f32.mrf.mxu0
  %1804 = vmatprep.mubr.f32.mxu0 0.0
  %1805 = vmatmul.mubr.f32.gmra.mxu0 %v775
  %v1806 = vpop.f32.mrf.mxu0
  %v1807 = vadd.f32 0.0, %v1806
  %v1808 = vpop.f32.mrf.mxu0
  %1809 = vmatprep.mubr.f32.mxu0 0.0
  %1810 = vmatmul.mubr.f32.gmra.mxu0 %v778
  %v1811 = vpop.f32.mrf.mxu0
  %v1812 = vadd.f32 0.0, %v1811
  %v1813 = vpop.f32.mrf.mxu0
  %1814 = vmatprep.mubr.f32.mxu0 0.0
  %1815 = vmatmul.mubr.f32.gmra.mxu0 %v781
  %v1816 = vpop.f32.mrf.mxu0
  %v1817 = vadd.f32 0.0, %v1816
  %v1818 = vpop.f32.mrf.mxu0
  %1819 = vmatprep.mubr.f32.mxu0 0.0
  %1820 = vmatmul.mubr.f32.gmra.mxu0 %v784
  %v1821 = vpop.f32.mrf.mxu0
  %v1822 = vadd.f32 0.0, %v1821
  %v1823 = vpop.f32.mrf.mxu0
  %1824 = vmatprep.mubr.f32.mxu0 0.0
  %1825 = vmatmul.mubr.f32.gmra.mxu0 %v787
  %v1826 = vpop.f32.mrf.mxu0
  %v1827 = vadd.f32 0.0, %v1826
  %v1828 = vpop.f32.mrf.mxu0
  %1829 = vmatprep.mubr.f32.mxu0 0.0
  %1830 = vmatmul.mubr.f32.gmra.mxu0 %v790
  %v1831 = vpop.f32.mrf.mxu0
  %v1832 = vadd.f32 0.0, %v1831
  %v1833 = vpop.f32.mrf.mxu0
  %1834 = vmatprep.mubr.f32.mxu0 0.0
  %1835 = vmatmul.mubr.f32.gmra.mxu0 %v793
  %v1836 = vpop.f32.mrf.mxu0
  %v1837 = vadd.f32 0.0, %v1836
  %v1838 = vpop.f32.mrf.mxu0
  %1839 = vmatprep.mubr.f32.mxu0 0.0
  %1840 = vmatmul.mubr.f32.gmra.mxu0 %v796
  %v1841 = vpop.f32.mrf.mxu0
  %v1842 = vadd.f32 0.0, %v1841
  %v1843 = vpop.f32.mrf.mxu0
  %1844 = vmatprep.mubr.f32.mxu0 0.0
  %1845 = vmatmul.mubr.f32.gmra.mxu0 %v799
  %v1846 = vpop.f32.mrf.mxu0
  %v1847 = vadd.f32 0.0, %v1846
  %v1848 = vpop.f32.mrf.mxu0
  %1849 = vdwg.mxu0
  %v1850 = vmax.f32 %v872, %v1117
  %v1851 = vmax.f32 %v877, %v1122
  %v1852 = vmax.f32 %v882, %v1127
  %v1853 = vmax.f32 %v887, %v1132
  %v1854 = vmax.f32 %v892, %v1137
  %v1855 = vmax.f32 %v897, %v1142
  %v1856 = vmax.f32 %v902, %v1147
  %v1857 = vmax.f32 %v907, %v1152
  %v1858 = vmax.f32 %v912, %v1157
  %v1859 = vmax.f32 %v917, %v1162
  %v1860 = vmax.f32 %v922, %v1167
  %v1861 = vmax.f32 %v927, %v1172
  %v1862 = vmax.f32 %v932, %v1177
  %v1863 = vmax.f32 %v937, %v1182
  %v1864 = vmax.f32 %v942, %v1187
  %v1865 = vmax.f32 %v947, %v1192
  %v1866 = vmax.f32 %v952, %v1197
  %v1867 = vmax.f32 %v957, %v1202
  %v1868 = vmax.f32 %v962, %v1207
  %v1869 = vmax.f32 %v967, %v1212
  %v1870 = vmax.f32 %v972, %v1217
  %v1871 = vmax.f32 %v977, %v1222
  %v1872 = vmax.f32 %v982, %v1227
  %v1873 = vmax.f32 %v987, %v1232
  %v1874 = vmax.f32 %v992, %v1237
  %v1875 = vmax.f32 %v997, %v1242
  %v1876 = vmax.f32 %v1002, %v1247
  %v1877 = vmax.f32 %v1007, %v1252
  %v1878 = vmax.f32 %v1012, %v1257
  %v1879 = vmax.f32 %v1017, %v1262
  %v1880 = vmax.f32 %v1022, %v1267
  %v1881 = vmax.f32 %v1027, %v1272
  %v1882 = vmax.f32 %v1032, %v1277
  %v1883 = vmax.f32 %v1037, %v1282
  %v1884 = vmax.f32 %v1042, %v1287
  %v1885 = vmax.f32 %v1047, %v1292
  %v1886 = vmax.f32 %v1052, %v1297
  %v1887 = vmax.f32 %v1057, %v1302
  %v1888 = vmax.f32 %v1062, %v1307
  %v1889 = vmax.f32 %v1067, %v1312
  %v1890 = vmax.f32 %v1072, %v1317
  %v1891 = vmax.f32 %v1077, %v1322
  %v1892 = vmax.f32 %v1082, %v1327
  %v1893 = vmax.f32 %v1087, %v1332
  %v1894 = vmax.f32 %v1092, %v1337
  %v1895 = vmax.f32 %v1097, %v1342
  %v1896 = vmax.f32 %v1102, %v1347
  %v1897 = vmax.f32 %v1107, %v1352
  %v1898 = vmax.f32 %v1112, %v1357
  %v1899 = vmax.f32 %v1362, %v1607
  %v1900 = vmax.f32 %v1367, %v1612
  %v1901 = vmax.f32 %v1372, %v1617
  %v1902 = vmax.f32 %v1377, %v1622
  %v1903 = vmax.f32 %v1382, %v1627
  %v1904 = vmax.f32 %v1387, %v1632
  %v1905 = vmax.f32 %v1392, %v1637
  %v1906 = vmax.f32 %v1397, %v1642
  %v1907 = vmax.f32 %v1402, %v1647
  %v1908 = vmax.f32 %v1407, %v1652
  %v1909 = vmax.f32 %v1412, %v1657
  %v1910 = vmax.f32 %v1417, %v1662
  %v1911 = vmax.f32 %v1422, %v1667
  %v1912 = vmax.f32 %v1427, %v1672
  %v1913 = vmax.f32 %v1432, %v1677
  %v1914 = vmax.f32 %v1437, %v1682
  %v1915 = vmax.f32 %v1442, %v1687
  %v1916 = vmax.f32 %v1447, %v1692
  %v1917 = vmax.f32 %v1452, %v1697
  %v1918 = vmax.f32 %v1457, %v1702
  %v1919 = vmax.f32 %v1462, %v1707
  %v1920 = vmax.f32 %v1467, %v1712
  %v1921 = vmax.f32 %v1472, %v1717
  %v1922 = vmax.f32 %v1477, %v1722
  %v1923 = vmax.f32 %v1482, %v1727
  %v1924 = vmax.f32 %v1487, %v1732
  %v1925 = vmax.f32 %v1492, %v1737
  %v1926 = vmax.f32 %v1497, %v1742
  %v1927 = vmax.f32 %v1502, %v1747
  %v1928 = vmax.f32 %v1507, %v1752
  %v1929 = vmax.f32 %v1512, %v1757
  %v1930 = vmax.f32 %v1517, %v1762
  %v1931 = vmax.f32 %v1522, %v1767
  %v1932 = vmax.f32 %v1527, %v1772
  %v1933 = vmax.f32 %v1532, %v1777
  %v1934 = vmax.f32 %v1537, %v1782
  %v1935 = vmax.f32 %v1542, %v1787
  %v1936 = vmax.f32 %v1547, %v1792
  %v1937 = vmax.f32 %v1552, %v1797
  %v1938 = vmax.f32 %v1557, %v1802
  %v1939 = vmax.f32 %v1562, %v1807
  %v1940 = vmax.f32 %v1567, %v1812
  %v1941 = vmax.f32 %v1572, %v1817
  %v1942 = vmax.f32 %v1577, %v1822
  %v1943 = vmax.f32 %v1582, %v1827
  %v1944 = vmax.f32 %v1587, %v1832
  %v1945 = vmax.f32 %v1592, %v1837
  %v1946 = vmax.f32 %v1597, %v1842
  %v1947 = vmax.f32 %v1602, %v1847
  %v1948 = vmax.f32 %v1850, %v1899
  %v1949 = vmax.f32 %v1851, %v1900
  %v1950 = vmax.f32 %v1852, %v1901
  %v1951 = vmax.f32 %v1853, %v1902
  %v1952 = vmax.f32 %v1854, %v1903
  %v1953 = vmax.f32 %v1855, %v1904
  %v1954 = vmax.f32 %v1856, %v1905
  %v1955 = vmax.f32 %v1857, %v1906
  %v1956 = vmax.f32 %v1858, %v1907
  %v1957 = vmax.f32 %v1859, %v1908
  %v1958 = vmax.f32 %v1860, %v1909
  %v1959 = vmax.f32 %v1861, %v1910
  %v1960 = vmax.f32 %v1862, %v1911
  %v1961 = vmax.f32 %v1863, %v1912
  %v1962 = vmax.f32 %v1864, %v1913
  %v1963 = vmax.f32 %v1865, %v1914
  %v1964 = vmax.f32 %v1866, %v1915
  %v1965 = vmax.f32 %v1867, %v1916
  %v1966 = vmax.f32 %v1868, %v1917
  %v1967 = vmax.f32 %v1869, %v1918
  %v1968 = vmax.f32 %v1870, %v1919
  %v1969 = vmax.f32 %v1871, %v1920
  %v1970 = vmax.f32 %v1872, %v1921
  %v1971 = vmax.f32 %v1873, %v1922
  %v1972 = vmax.f32 %v1874, %v1923
  %v1973 = vmax.f32 %v1875, %v1924
  %v1974 = vmax.f32 %v1876, %v1925
  %v1975 = vmax.f32 %v1877, %v1926
  %v1976 = vmax.f32 %v1878, %v1927
  %v1977 = vmax.f32 %v1879, %v1928
  %v1978 = vmax.f32 %v1880, %v1929
  %v1979 = vmax.f32 %v1881, %v1930
  %v1980 = vmax.f32 %v1882, %v1931
  %v1981 = vmax.f32 %v1883, %v1932
  %v1982 = vmax.f32 %v1884, %v1933
  %v1983 = vmax.f32 %v1885, %v1934
  %v1984 = vmax.f32 %v1886, %v1935
  %v1985 = vmax.f32 %v1887, %v1936
  %v1986 = vmax.f32 %v1888, %v1937
  %v1987 = vmax.f32 %v1889, %v1938
  %v1988 = vmax.f32 %v1890, %v1939
  %v1989 = vmax.f32 %v1891, %v1940
  %v1990 = vmax.f32 %v1892, %v1941
  %v1991 = vmax.f32 %v1893, %v1942
  %v1992 = vmax.f32 %v1894, %v1943
  %v1993 = vmax.f32 %v1895, %v1944
  %v1994 = vmax.f32 %v1896, %v1945
  %v1995 = vmax.f32 %v1897, %v1946
  %v1996 = vmax.f32 %v1898, %v1947
  %v1997 = vld [vmem:[%s2] sm:$0x1]
  %v1999 = vlaneseq
  %v2000 = vshrl.u32 %v1999, 7
  %v2001 = vsub.s32 0, %v2000
  %v2002 = vrot.slane %v1997, %v2001
  %v2004 = vadd.f32 %v1948, %v2002
  %v2005 = vadd.f32 %v1949, %v2002
  %v2006 = vadd.f32 %v1950, %v2002
  %v2007 = vadd.f32 %v1951, %v2002
  %v2008 = vadd.f32 %v1952, %v2002
  %v2009 = vadd.f32 %v1953, %v2002
  %v2010 = vadd.f32 %v1954, %v2002
  %v2011 = vadd.f32 %v1955, %v2002
  %v2012 = vadd.f32 %v1956, %v2002
  %v2013 = vadd.f32 %v1957, %v2002
  %v2014 = vadd.f32 %v1958, %v2002
  %v2015 = vadd.f32 %v1959, %v2002
  %v2016 = vadd.f32 %v1960, %v2002
  %v2017 = vadd.f32 %v1961, %v2002
  %v2018 = vadd.f32 %v1962, %v2002
  %v2019 = vadd.f32 %v1963, %v2002
  %v2020 = vadd.f32 %v1964, %v2002
  %v2021 = vadd.f32 %v1965, %v2002
  %v2022 = vadd.f32 %v1966, %v2002
  %v2023 = vadd.f32 %v1967, %v2002
  %v2024 = vadd.f32 %v1968, %v2002
  %v2025 = vadd.f32 %v1969, %v2002
  %v2026 = vadd.f32 %v1970, %v2002
  %v2027 = vadd.f32 %v1971, %v2002
  %v2028 = vadd.f32 %v1972, %v2002
  %v2029 = vadd.f32 %v1973, %v2002
  %v2030 = vadd.f32 %v1974, %v2002
  %v2031 = vadd.f32 %v1975, %v2002
  %v2032 = vadd.f32 %v1976, %v2002
  %v2033 = vadd.f32 %v1977, %v2002
  %v2034 = vadd.f32 %v1978, %v2002
  %v2035 = vadd.f32 %v1979, %v2002
  %v2036 = vadd.f32 %v1980, %v2002
  %v2037 = vadd.f32 %v1981, %v2002
  %v2038 = vadd.f32 %v1982, %v2002
  %v2039 = vadd.f32 %v1983, %v2002
  %v2040 = vadd.f32 %v1984, %v2002
  %v2041 = vadd.f32 %v1985, %v2002
  %v2042 = vadd.f32 %v1986, %v2002
  %v2043 = vadd.f32 %v1987, %v2002
  %v2044 = vadd.f32 %v1988, %v2002
  %v2045 = vadd.f32 %v1989, %v2002
  %v2046 = vadd.f32 %v1990, %v2002
  %v2047 = vadd.f32 %v1991, %v2002
  %v2048 = vadd.f32 %v1992, %v2002
  %v2049 = vadd.f32 %v1993, %v2002
  %v2050 = vadd.f32 %v1994, %v2002
  %v2051 = vadd.f32 %v1995, %v2002
  %v2052 = vadd.f32 %v1996, %v2002
  %v2053 = vmax.f32 %v2004, 0.0
  %v2054 = vmax.f32 %v2005, 0.0
  %v2055 = vmax.f32 %v2006, 0.0
  %v2056 = vmax.f32 %v2007, 0.0
  %v2057 = vmax.f32 %v2008, 0.0
  %v2058 = vmax.f32 %v2009, 0.0
  %v2059 = vmax.f32 %v2010, 0.0
  %v2060 = vmax.f32 %v2011, 0.0
  %v2061 = vmax.f32 %v2012, 0.0
  %v2062 = vmax.f32 %v2013, 0.0
  %v2063 = vmax.f32 %v2014, 0.0
  %v2064 = vmax.f32 %v2015, 0.0
  %v2065 = vmax.f32 %v2016, 0.0
  %v2066 = vmax.f32 %v2017, 0.0
  %v2067 = vmax.f32 %v2018, 0.0
  %v2068 = vmax.f32 %v2019, 0.0
  %v2069 = vmax.f32 %v2020, 0.0
  %v2070 = vmax.f32 %v2021, 0.0
  %v2071 = vmax.f32 %v2022, 0.0
  %v2072 = vmax.f32 %v2023, 0.0
  %v2073 = vmax.f32 %v2024, 0.0
  %v2074 = vmax.f32 %v2025, 0.0
  %v2075 = vmax.f32 %v2026, 0.0
  %v2076 = vmax.f32 %v2027, 0.0
  %v2077 = vmax.f32 %v2028, 0.0
  %v2078 = vmax.f32 %v2029, 0.0
  %v2079 = vmax.f32 %v2030, 0.0
  %v2080 = vmax.f32 %v2031, 0.0
  %v2081 = vmax.f32 %v2032, 0.0
  %v2082 = vmax.f32 %v2033, 0.0
  %v2083 = vmax.f32 %v2034, 0.0
  %v2084 = vmax.f32 %v2035, 0.0
  %v2085 = vmax.f32 %v2036, 0.0
  %v2086 = vmax.f32 %v2037, 0.0
  %v2087 = vmax.f32 %v2038, 0.0
  %v2088 = vmax.f32 %v2039, 0.0
  %v2089 = vmax.f32 %v2040, 0.0
  %v2090 = vmax.f32 %v2041, 0.0
  %v2091 = vmax.f32 %v2042, 0.0
  %v2092 = vmax.f32 %v2043, 0.0
  %v2093 = vmax.f32 %v2044, 0.0
  %v2094 = vmax.f32 %v2045, 0.0
  %v2095 = vmax.f32 %v2046, 0.0
  %v2096 = vmax.f32 %v2047, 0.0
  %v2097 = vmax.f32 %v2048, 0.0
  %v2098 = vmax.f32 %v2049, 0.0
  %v2099 = vmax.f32 %v2050, 0.0
  %v2100 = vmax.f32 %v2051, 0.0
  %v2101 = vmax.f32 %v2052, 0.0
  %2102 = vst [vmem:[%s3] sm:$0xff] %v2053
  %2103 = vst [vmem:[%s3 + $0x8] sm:$0xff] %v2054
  %2104 = vst [vmem:[%s3 + $0x10] sm:$0xff] %v2055
  %2105 = vst [vmem:[%s3 + $0x18] sm:$0xff] %v2056
  %2106 = vst [vmem:[%s3 + $0x20] sm:$0xff] %v2057
  %2107 = vst [vmem:[%s3 + $0x28] sm:$0xff] %v2058
  %2108 = vst [vmem:[%s3 + $0x30] sm:$0xff] %v2059
  %2109 = vst [vmem:[%s3 + $0x38] sm:$0xff] %v2060
  %2110 = vst [vmem:[%s3 + $0x40] sm:$0xff] %v2061
  %2111 = vst [vmem:[%s3 + $0x48] sm:$0xff] %v2062
  %2112 = vst [vmem:[%s3 + $0x50] sm:$0xff] %v2063
  %2113 = vst [vmem:[%s3 + $0x58] sm:$0xff] %v2064
  %2114 = vst [vmem:[%s3 + $0x60] sm:$0xff] %v2065
  %2115 = vst [vmem:[%s3 + $0x68] sm:$0xff] %v2066
  %2116 = vst [vmem:[%s3 + $0x70] sm:$0xff] %v2067
  %2117 = vst [vmem:[%s3 + $0x78] sm:$0xff] %v2068
  %2118 = vst [vmem:[%s3 + $0x80] sm:$0xff] %v2069
  %2119 = vst [vmem:[%s3 + $0x88] sm:$0xff] %v2070
  %2120 = vst [vmem:[%s3 + $0x90] sm:$0xff] %v2071
  %2121 = vst [vmem:[%s3 + $0x98] sm:$0xff] %v2072
  %2122 = vst [vmem:[%s3 + $0xa0] sm:$0xff] %v2073
  %2123 = vst [vmem:[%s3 + $0xa8] sm:$0xff] %v2074
  %2124 = vst [vmem:[%s3 + $0xb0] sm:$0xff] %v2075
  %2125 = vst [vmem:[%s3 + $0xb8] sm:$0xff] %v2076
  %2126 = vst [vmem:[%s3 + $0xc0] sm:$0xff] %v2077
  %2127 = vst [vmem:[%s3 + $0xc8] sm:$0xff] %v2078
  %2128 = vst [vmem:[%s3 + $0xd0] sm:$0xff] %v2079
  %2129 = vst [vmem:[%s3 + $0xd8] sm:$0xff] %v2080
  %2130 = vst [vmem:[%s3 + $0xe0] sm:$0xff] %v2081
  %2131 = vst [vmem:[%s3 + $0xe8] sm:$0xff] %v2082
  %2132 = vst [vmem:[%s3 + $0xf0] sm:$0xff] %v2083
  %2133 = vst [vmem:[%s3 + $0xf8] sm:$0xff] %v2084
  %2134 = vst [vmem:[%s3 + $0x100] sm:$0xff] %v2085
  %2135 = vst [vmem:[%s3 + $0x108] sm:$0xff] %v2086
  %2136 = vst [vmem:[%s3 + $0x110] sm:$0xff] %v2087
  %2137 = vst [vmem:[%s3 + $0x118] sm:$0xff] %v2088
  %2138 = vst [vmem:[%s3 + $0x120] sm:$0xff] %v2089
  %2139 = vst [vmem:[%s3 + $0x128] sm:$0xff] %v2090
  %2140 = vst [vmem:[%s3 + $0x130] sm:$0xff] %v2091
  %2141 = vst [vmem:[%s3 + $0x138] sm:$0xff] %v2092
  %2142 = vst [vmem:[%s3 + $0x140] sm:$0xff] %v2093
  %2143 = vst [vmem:[%s3 + $0x148] sm:$0xff] %v2094
  %2144 = vst [vmem:[%s3 + $0x150] sm:$0xff] %v2095
  %2145 = vst [vmem:[%s3 + $0x158] sm:$0xff] %v2096
  %2146 = vst [vmem:[%s3 + $0x160] sm:$0xff] %v2097
  %2147 = vst [vmem:[%s3 + $0x168] sm:$0xff] %v2098
  %2148 = vst [vmem:[%s3 + $0x170] sm:$0xff] %v2099
  %2149 = vst [vmem:[%s3 + $0x178] sm:$0xff] %v2100
  %2150 = vst [vmem:[%s3 + $0x180] sm:$0xff] %v2101
  // Predicated region
  $region14: #{cnn_forward.3} parent=0 // pred_check
    _
  $region15: #{cnn_forward.3} parent=0 // pred_check_branch
    %2152 = sbr.rel (0) target = $region17
  $region16: #{cnn_forward.3} parent=0 // pred_region
    _
  $region17: #{cnn_forward.3} parent=0 // pred_fallthru
    _
  // Predicated region
  $region18: #{cnn_forward.3} parent=0 // pred_check
    _
  $region19: #{cnn_forward.3} parent=0 // pred_check_branch
    %2154 = sbr.rel (0) target = $region21
  $region20: #{cnn_forward.3} parent=0 // pred_region
    _
  $region21: #{cnn_forward.3} parent=0 // pred_fallthru
    _

// kernel: cnn_forward.4
$region0: #{cnn_forward.4}
  #allocation0 [shape = 'u32[]', space=smem, size = 0x4, offset = 0x4, fixed_abs, tag = 'smem constant byte address 0x4 - core index']
  #allocation1 [shape = 'u32[144,128]{1,0:T(1,128)}', space=vmem, size = 0x12000, scoped, tag = 'internal scratch']
  %s0 = inlined_call_operand.vmem [shape: f32[1,416,72], index: 0, kind: input, shape index: {}]
  %s1 = inlined_call_operand.vmem [shape: f32[72,128], index: 1, kind: input, shape index: {}]
  %s2 = inlined_call_operand.vmem [shape: f32[1,128], index: 2, kind: input, shape index: {}]
  %s3 = inlined_call_operand.vmem [shape: f32[104,128], index: 3, kind: output, shape index: {}]
  %s4 = sld [smem:[#allocation0]]
  $region22: #{cnn_forward.4} parent=0
    _
  %s6 = ssub.s32 1, %s4
  %s7 = scalar_select 0, %s6, %s4
  // Predicated region
  $region2: #{cnn_forward.4} parent=0 // pred_check
    _
  $region3: #{cnn_forward.4} parent=0 // pred_check_branch
    %9 = sbr.rel (0) target = $region5
  $region4: #{cnn_forward.4} parent=0 // pred_region
    _
  $region5: #{cnn_forward.4} parent=0 // pred_fallthru
    _
  // Predicated region
  $region6: #{cnn_forward.4} parent=0 // pred_check
    _
  $region7: #{cnn_forward.4} parent=0 // pred_check_branch
    %11 = sbr.rel (0) target = $region9
  $region8: #{cnn_forward.4} parent=0 // pred_region
    _
  $region9: #{cnn_forward.4} parent=0 // pred_fallthru
    _
  // Predicated region
  $region10: #{cnn_forward.4} parent=0 // pred_check
    _
  $region11: #{cnn_forward.4} parent=0 // pred_check_branch
    %13 = sbr.rel (0) target = $region13
  $region12: #{cnn_forward.4} parent=0 // pred_region
    _
  $region13: #{cnn_forward.4} parent=0 // pred_fallthru
    _
  %v14 = vld [vmem:[%s0] sm:$0xff]
  %v15 = vld [vmem:[%s0 + $0x8] sm:$0xff]
  %v16 = vld [vmem:[%s0 + $0x10] sm:$0xff]
  %v17 = vld [vmem:[%s0 + $0x18] sm:$0xff]
  %v18 = vld [vmem:[%s0 + $0x20] sm:$0xff]
  %v19 = vld [vmem:[%s0 + $0x28] sm:$0xff]
  %v20 = vld [vmem:[%s0 + $0x30] sm:$0xff]
  %v21 = vld [vmem:[%s0 + $0x38] sm:$0xff]
  %v22 = vld [vmem:[%s0 + $0x40] sm:$0xff]
  %v23 = vld [vmem:[%s0 + $0x48] sm:$0xff]
  %v24 = vld [vmem:[%s0 + $0x50] sm:$0xff]
  %v25 = vld [vmem:[%s0 + $0x58] sm:$0xff]
  %v26 = vld [vmem:[%s0 + $0x60] sm:$0xff]
  %v27 = vld [vmem:[%s0 + $0x68] sm:$0xff]
  %v28 = vld [vmem:[%s0 + $0x70] sm:$0xff]
  %v29 = vld [vmem:[%s0 + $0x78] sm:$0xff]
  %v30 = vld [vmem:[%s0 + $0x80] sm:$0xff]
  %v31 = vld [vmem:[%s0 + $0x88] sm:$0xff]
  %v32 = vld [vmem:[%s0 + $0x90] sm:$0xff]
  %v33 = vld [vmem:[%s0 + $0x98] sm:$0xff]
  %v34 = vld [vmem:[%s0 + $0xa0] sm:$0xff]
  %v35 = vld [vmem:[%s0 + $0xa8] sm:$0xff]
  %v36 = vld [vmem:[%s0 + $0xb0] sm:$0xff]
  %v37 = vld [vmem:[%s0 + $0xb8] sm:$0xff]
  %v38 = vld [vmem:[%s0 + $0xc0] sm:$0xff]
  %v39 = vld [vmem:[%s0 + $0xc8] sm:$0xff]
  %v40 = vld [vmem:[%s0 + $0xd0] sm:$0xff]
  %v41 = vld [vmem:[%s0 + $0xd8] sm:$0xff]
  %v42 = vld [vmem:[%s0 + $0xe0] sm:$0xff]
  %v43 = vld [vmem:[%s0 + $0xe8] sm:$0xff]
  %v44 = vld [vmem:[%s0 + $0xf0] sm:$0xff]
  %v45 = vld [vmem:[%s0 + $0xf8] sm:$0xff]
  %v46 = vld [vmem:[%s0 + $0x100] sm:$0xff]
  %v47 = vld [vmem:[%s0 + $0x108] sm:$0xff]
  %v48 = vld [vmem:[%s0 + $0x110] sm:$0xff]
  %v49 = vld [vmem:[%s0 + $0x118] sm:$0xff]
  %v50 = vld [vmem:[%s0 + $0x120] sm:$0xff]
  %v51 = vld [vmem:[%s0 + $0x128] sm:$0xff]
  %v52 = vld [vmem:[%s0 + $0x130] sm:$0xff]
  %v53 = vld [vmem:[%s0 + $0x138] sm:$0xff]
  %v54 = vld [vmem:[%s0 + $0x140] sm:$0xff]
  %v55 = vld [vmem:[%s0 + $0x148] sm:$0xff]
  %v56 = vld [vmem:[%s0 + $0x150] sm:$0xff]
  %v57 = vld [vmem:[%s0 + $0x158] sm:$0xff]
  %v58 = vld [vmem:[%s0 + $0x160] sm:$0xff]
  %v59 = vld [vmem:[%s0 + $0x168] sm:$0xff]
  %v60 = vld [vmem:[%s0 + $0x170] sm:$0xff]
  %v61 = vld [vmem:[%s0 + $0x178] sm:$0xff]
  %v62 = vld [vmem:[%s0 + $0x180] sm:$0xff]
  %v63 = vld [vmem:[%s0 + $0x188] sm:$0xff]
  %v64 = vld [vmem:[%s0 + $0x190] sm:$0xff]
  %v65 = vld [vmem:[%s0 + $0x198] sm:$0xff]
  %v66 = vld [vmem:[%s1] sm:$0xff]
  %v67 = vld [vmem:[%s1 + $0x8] sm:$0xff]
  %v68 = vld [vmem:[%s1 + $0x10] sm:$0xff]
  %v69 = vld [vmem:[%s1 + $0x18] sm:$0xff]
  %v70 = vld [vmem:[%s1 + $0x20] sm:$0xff]
  %v71 = vld [vmem:[%s1 + $0x28] sm:$0xff]
  %v72 = vld [vmem:[%s1 + $0x30] sm:$0xff]
  %v73 = vld [vmem:[%s1 + $0x38] sm:$0xff]
  %v74 = vld [vmem:[%s1 + $0x40] sm:$0xff]
  %vm75 = vcmask 588800
  %v77 = vsel %vm75, %v14, 0
  %v80 = vsel %vm75, %v15, 0
  %v83 = vsel %vm75, %v16, 0
  %v86 = vsel %vm75, %v17, 0
  %v89 = vsel %vm75, %v18, 0
  %v92 = vsel %vm75, %v19, 0
  %v95 = vsel %vm75, %v20, 0
  %v98 = vsel %vm75, %v21, 0
  %v101 = vsel %vm75, %v22, 0
  %v104 = vsel %vm75, %v23, 0
  %v107 = vsel %vm75, %v24, 0
  %v110 = vsel %vm75, %v25, 0
  %v113 = vsel %vm75, %v26, 0
  %v116 = vsel %vm75, %v27, 0
  %v119 = vsel %vm75, %v28, 0
  %v122 = vsel %vm75, %v29, 0
  %v125 = vsel %vm75, %v30, 0
  %v128 = vsel %vm75, %v31, 0
  %v131 = vsel %vm75, %v32, 0
  %v134 = vsel %vm75, %v33, 0
  %v137 = vsel %vm75, %v34, 0
  %v140 = vsel %vm75, %v35, 0
  %v143 = vsel %vm75, %v36, 0
  %v146 = vsel %vm75, %v37, 0
  %v149 = vsel %vm75, %v38, 0
  %v152 = vsel %vm75, %v39, 0
  %v155 = vsel %vm75, %v40, 0
  %v158 = vsel %vm75, %v41, 0
  %v161 = vsel %vm75, %v42, 0
  %v164 = vsel %vm75, %v43, 0
  %v167 = vsel %vm75, %v44, 0
  %v170 = vsel %vm75, %v45, 0
  %v173 = vsel %vm75, %v46, 0
  %v176 = vsel %vm75, %v47, 0
  %v179 = vsel %vm75, %v48, 0
  %v182 = vsel %vm75, %v49, 0
  %v185 = vsel %vm75, %v50, 0
  %v188 = vsel %vm75, %v51, 0
  %v191 = vsel %vm75, %v52, 0
  %v194 = vsel %vm75, %v53, 0
  %v197 = vsel %vm75, %v54, 0
  %v200 = vsel %vm75, %v55, 0
  %v203 = vsel %vm75, %v56, 0
  %v206 = vsel %vm75, %v57, 0
  %v209 = vsel %vm75, %v58, 0
  %v212 = vsel %vm75, %v59, 0
  %v215 = vsel %vm75, %v60, 0
  %v218 = vsel %vm75, %v61, 0
  %v221 = vsel %vm75, %v62, 0
  %v224 = vsel %vm75, %v63, 0
  %v227 = vsel %vm75, %v64, 0
  %v230 = vsel %vm75, %v65, 0
  %232 = vmatprep.subr.mxu0 0.0
  %233 = vmatpush1.msra.mxu0 0.0
  %234 = vmatprep.subr.mxu0 0.0
  %235 = vmatpush1.msra.mxu0 0.0
  %236 = vmatprep.subr.mxu0 0.0
  %237 = vmatpush1.msra.mxu0 0.0
  %238 = vmatprep.subr.mxu0 0.0
  %239 = vmatpush1.msra.mxu0 0.0
  %240 = vmatprep.subr.mxu0 0.0
  %241 = vmatpush1.msra.mxu0 0.0
  %242 = vmatprep.subr.mxu0 0.0
  %243 = vmatpush1.msra.mxu0 0.0
  %244 = vmatprep.subr.mxu0 0.0
  %245 = vmatpush1.msra.mxu0 0.0
  %246 = vmatprep.subr.mxu0 0.0
  %247 = vmatpush1.msra.mxu0 %v74
  %248 = vmatprep.subr.mxu0 0.0
  %249 = vmatpush1.msra.mxu0 %v73
  %250 = vmatprep.subr.mxu0 0.0
  %251 = vmatpush1.msra.mxu0 %v72
  %252 = vmatprep.subr.mxu0 0.0
  %253 = vmatpush1.msra.mxu0 %v71
  %254 = vmatprep.subr.mxu0 0.0
  %255 = vmatpush1.msra.mxu0 %v70
  %256 = vmatprep.subr.mxu0 0.0
  %257 = vmatpush1.msra.mxu0 %v69
  %258 = vmatprep.subr.mxu0 0.0
  %259 = vmatpush1.msra.mxu0 %v68
  %260 = vmatprep.subr.mxu0 0.0
  %261 = vmatpush1.msra.mxu0 %v67
  %262 = vmatprep.subr.mxu0 0.0
  %263 = vmatpush1.msra.mxu0 %v66
  %264 = vmatprep.subr.mxu0 0.0
  %265 = vmatpush2.msra.mxu0 0.0
  %266 = vmatprep.subr.mxu0 0.0
  %267 = vmatpush2.msra.mxu0 0.0
  %268 = vmatprep.subr.mxu0 0.0
  %269 = vmatpush2.msra.mxu0 0.0
  %270 = vmatprep.subr.mxu0 0.0
  %271 = vmatpush2.msra.mxu0 0.0
  %272 = vmatprep.subr.mxu0 0.0
  %273 = vmatpush2.msra.mxu0 0.0
  %274 = vmatprep.subr.mxu0 0.0
  %275 = vmatpush2.msra.mxu0 0.0
  %276 = vmatprep.subr.mxu0 0.0
  %277 = vmatpush2.msra.mxu0 0.0
  %278 = vmatprep.subr.mxu0 0.0
  %279 = vmatpush2.msra.mxu0 0.0
  %280 = vmatprep.subr.mxu0 0.0
  %281 = vmatpush2.msra.mxu0 0.0
  %282 = vmatprep.subr.mxu0 0.0
  %283 = vmatpush2.msra.mxu0 0.0
  %284 = vmatprep.subr.mxu0 0.0
  %285 = vmatpush2.msra.mxu0 0.0
  %286 = vmatprep.subr.mxu0 0.0
  %287 = vmatpush2.msra.mxu0 0.0
  %288 = vmatprep.subr.mxu0 0.0
  %289 = vmatpush2.msra.mxu0 0.0
  %290 = vmatprep.subr.mxu0 0.0
  %291 = vmatpush2.msra.mxu0 0.0
  %292 = vmatprep.subr.mxu0 0.0
  %293 = vmatpush2.msra.mxu0 0.0
  %294 = vmatprep.subr.mxu0 0.0
  %295 = vmatpush2.msra.mxu0 0.0
  %296 = vmatprep.mubr.f32.mxu0 0.0
  %297 = vmatmul.mubr.f32.gmra.mxu0 %v77
  %v298 = vpop.f32.mrf.mxu0
  %v299 = vadd.f32 0.0, %v298
  %v300 = vpop.f32.mrf.mxu0
  %301 = vmatprep.mubr.f32.mxu0 0.0
  %302 = vmatmul.mubr.f32.gmra.mxu0 %v80
  %v303 = vpop.f32.mrf.mxu0
  %v304 = vadd.f32 0.0, %v303
  %v305 = vpop.f32.mrf.mxu0
  %306 = vmatprep.mubr.f32.mxu0 0.0
  %307 = vmatmul.mubr.f32.gmra.mxu0 %v83
  %v308 = vpop.f32.mrf.mxu0
  %v309 = vadd.f32 0.0, %v308
  %v310 = vpop.f32.mrf.mxu0
  %311 = vmatprep.mubr.f32.mxu0 0.0
  %312 = vmatmul.mubr.f32.gmra.mxu0 %v86
  %v313 = vpop.f32.mrf.mxu0
  %v314 = vadd.f32 0.0, %v313
  %v315 = vpop.f32.mrf.mxu0
  %316 = vmatprep.mubr.f32.mxu0 0.0
  %317 = vmatmul.mubr.f32.gmra.mxu0 %v89
  %v318 = vpop.f32.mrf.mxu0
  %v319 = vadd.f32 0.0, %v318
  %v320 = vpop.f32.mrf.mxu0
  %321 = vmatprep.mubr.f32.mxu0 0.0
  %322 = vmatmul.mubr.f32.gmra.mxu0 %v92
  %v323 = vpop.f32.mrf.mxu0
  %v324 = vadd.f32 0.0, %v323
  %v325 = vpop.f32.mrf.mxu0
  %326 = vmatprep.mubr.f32.mxu0 0.0
  %327 = vmatmul.mubr.f32.gmra.mxu0 %v95
  %v328 = vpop.f32.mrf.mxu0
  %v329 = vadd.f32 0.0, %v328
  %v330 = vpop.f32.mrf.mxu0
  %331 = vmatprep.mubr.f32.mxu0 0.0
  %332 = vmatmul.mubr.f32.gmra.mxu0 %v98
  %v333 = vpop.f32.mrf.mxu0
  %v334 = vadd.f32 0.0, %v333
  %v335 = vpop.f32.mrf.mxu0
  %336 = vmatprep.mubr.f32.mxu0 0.0
  %337 = vmatmul.mubr.f32.gmra.mxu0 %v101
  %v338 = vpop.f32.mrf.mxu0
  %v339 = vadd.f32 0.0, %v338
  %v340 = vpop.f32.mrf.mxu0
  %341 = vmatprep.mubr.f32.mxu0 0.0
  %342 = vmatmul.mubr.f32.gmra.mxu0 %v104
  %v343 = vpop.f32.mrf.mxu0
  %v344 = vadd.f32 0.0, %v343
  %v345 = vpop.f32.mrf.mxu0
  %346 = vmatprep.mubr.f32.mxu0 0.0
  %347 = vmatmul.mubr.f32.gmra.mxu0 %v107
  %v348 = vpop.f32.mrf.mxu0
  %v349 = vadd.f32 0.0, %v348
  %v350 = vpop.f32.mrf.mxu0
  %351 = vmatprep.mubr.f32.mxu0 0.0
  %352 = vmatmul.mubr.f32.gmra.mxu0 %v110
  %v353 = vpop.f32.mrf.mxu0
  %v354 = vadd.f32 0.0, %v353
  %v355 = vpop.f32.mrf.mxu0
  %356 = vmatprep.mubr.f32.mxu0 0.0
  %357 = vmatmul.mubr.f32.gmra.mxu0 %v113
  %v358 = vpop.f32.mrf.mxu0
  %v359 = vadd.f32 0.0, %v358
  %v360 = vpop.f32.mrf.mxu0
  %361 = vmatprep.mubr.f32.mxu0 0.0
  %362 = vmatmul.mubr.f32.gmra.mxu0 %v116
  %v363 = vpop.f32.mrf.mxu0
  %v364 = vadd.f32 0.0, %v363
  %v365 = vpop.f32.mrf.mxu0
  %366 = vmatprep.mubr.f32.mxu0 0.0
  %367 = vmatmul.mubr.f32.gmra.mxu0 %v119
  %v368 = vpop.f32.mrf.mxu0
  %v369 = vadd.f32 0.0, %v368
  %v370 = vpop.f32.mrf.mxu0
  %371 = vmatprep.mubr.f32.mxu0 0.0
  %372 = vmatmul.mubr.f32.gmra.mxu0 %v122
  %v373 = vpop.f32.mrf.mxu0
  %v374 = vadd.f32 0.0, %v373
  %v375 = vpop.f32.mrf.mxu0
  %376 = vmatprep.mubr.f32.mxu0 0.0
  %377 = vmatmul.mubr.f32.gmra.mxu0 %v125
  %v378 = vpop.f32.mrf.mxu0
  %v379 = vadd.f32 0.0, %v378
  %v380 = vpop.f32.mrf.mxu0
  %381 = vmatprep.mubr.f32.mxu0 0.0
  %382 = vmatmul.mubr.f32.gmra.mxu0 %v128
  %v383 = vpop.f32.mrf.mxu0
  %v384 = vadd.f32 0.0, %v383
  %v385 = vpop.f32.mrf.mxu0
  %386 = vmatprep.mubr.f32.mxu0 0.0
  %387 = vmatmul.mubr.f32.gmra.mxu0 %v131
  %v388 = vpop.f32.mrf.mxu0
  %v389 = vadd.f32 0.0, %v388
  %v390 = vpop.f32.mrf.mxu0
  %391 = vmatprep.mubr.f32.mxu0 0.0
  %392 = vmatmul.mubr.f32.gmra.mxu0 %v134
  %v393 = vpop.f32.mrf.mxu0
  %v394 = vadd.f32 0.0, %v393
  %v395 = vpop.f32.mrf.mxu0
  %396 = vmatprep.mubr.f32.mxu0 0.0
  %397 = vmatmul.mubr.f32.gmra.mxu0 %v137
  %v398 = vpop.f32.mrf.mxu0
  %v399 = vadd.f32 0.0, %v398
  %v400 = vpop.f32.mrf.mxu0
  %401 = vmatprep.mubr.f32.mxu0 0.0
  %402 = vmatmul.mubr.f32.gmra.mxu0 %v140
  %v403 = vpop.f32.mrf.mxu0
  %v404 = vadd.f32 0.0, %v403
  %v405 = vpop.f32.mrf.mxu0
  %406 = vmatprep.mubr.f32.mxu0 0.0
  %407 = vmatmul.mubr.f32.gmra.mxu0 %v143
  %v408 = vpop.f32.mrf.mxu0
  %v409 = vadd.f32 0.0, %v408
  %v410 = vpop.f32.mrf.mxu0
  %411 = vmatprep.mubr.f32.mxu0 0.0
  %412 = vmatmul.mubr.f32.gmra.mxu0 %v146
  %v413 = vpop.f32.mrf.mxu0
  %v414 = vadd.f32 0.0, %v413
  %v415 = vpop.f32.mrf.mxu0
  %416 = vmatprep.mubr.f32.mxu0 0.0
  %417 = vmatmul.mubr.f32.gmra.mxu0 %v149
  %v418 = vpop.f32.mrf.mxu0
  %v419 = vadd.f32 0.0, %v418
  %v420 = vpop.f32.mrf.mxu0
  %421 = vmatprep.mubr.f32.mxu0 0.0
  %422 = vmatmul.mubr.f32.gmra.mxu0 %v152
  %v423 = vpop.f32.mrf.mxu0
  %v424 = vadd.f32 0.0, %v423
  %v425 = vpop.f32.mrf.mxu0
  %426 = vmatprep.mubr.f32.mxu0 0.0
  %427 = vmatmul.mubr.f32.gmra.mxu0 %v155
  %v428 = vpop.f32.mrf.mxu0
  %v429 = vadd.f32 0.0, %v428
  %v430 = vpop.f32.mrf.mxu0
  %431 = vmatprep.mubr.f32.mxu0 0.0
  %432 = vmatmul.mubr.f32.gmra.mxu0 %v158
  %v433 = vpop.f32.mrf.mxu0
  %v434 = vadd.f32 0.0, %v433
  %v435 = vpop.f32.mrf.mxu0
  %436 = vmatprep.mubr.f32.mxu0 0.0
  %437 = vmatmul.mubr.f32.gmra.mxu0 %v161
  %v438 = vpop.f32.mrf.mxu0
  %v439 = vadd.f32 0.0, %v438
  %v440 = vpop.f32.mrf.mxu0
  %441 = vmatprep.mubr.f32.mxu0 0.0
  %442 = vmatmul.mubr.f32.gmra.mxu0 %v164
  %v443 = vpop.f32.mrf.mxu0
  %v444 = vadd.f32 0.0, %v443
  %v445 = vpop.f32.mrf.mxu0
  %446 = vmatprep.mubr.f32.mxu0 0.0
  %447 = vmatmul.mubr.f32.gmra.mxu0 %v167
  %v448 = vpop.f32.mrf.mxu0
  %v449 = vadd.f32 0.0, %v448
  %v450 = vpop.f32.mrf.mxu0
  %451 = vmatprep.mubr.f32.mxu0 0.0
  %452 = vmatmul.mubr.f32.gmra.mxu0 %v170
  %v453 = vpop.f32.mrf.mxu0
  %v454 = vadd.f32 0.0, %v453
  %v455 = vpop.f32.mrf.mxu0
  %456 = vmatprep.mubr.f32.mxu0 0.0
  %457 = vmatmul.mubr.f32.gmra.mxu0 %v173
  %v458 = vpop.f32.mrf.mxu0
  %v459 = vadd.f32 0.0, %v458
  %v460 = vpop.f32.mrf.mxu0
  %461 = vmatprep.mubr.f32.mxu0 0.0
  %462 = vmatmul.mubr.f32.gmra.mxu0 %v176
  %v463 = vpop.f32.mrf.mxu0
  %v464 = vadd.f32 0.0, %v463
  %v465 = vpop.f32.mrf.mxu0
  %466 = vmatprep.mubr.f32.mxu0 0.0
  %467 = vmatmul.mubr.f32.gmra.mxu0 %v179
  %v468 = vpop.f32.mrf.mxu0
  %v469 = vadd.f32 0.0, %v468
  %v470 = vpop.f32.mrf.mxu0
  %471 = vmatprep.mubr.f32.mxu0 0.0
  %472 = vmatmul.mubr.f32.gmra.mxu0 %v182
  %v473 = vpop.f32.mrf.mxu0
  %v474 = vadd.f32 0.0, %v473
  %v475 = vpop.f32.mrf.mxu0
  %476 = vmatprep.mubr.f32.mxu0 0.0
  %477 = vmatmul.mubr.f32.gmra.mxu0 %v185
  %v478 = vpop.f32.mrf.mxu0
  %v479 = vadd.f32 0.0, %v478
  %v480 = vpop.f32.mrf.mxu0
  %481 = vmatprep.mubr.f32.mxu0 0.0
  %482 = vmatmul.mubr.f32.gmra.mxu0 %v188
  %v483 = vpop.f32.mrf.mxu0
  %v484 = vadd.f32 0.0, %v483
  %v485 = vpop.f32.mrf.mxu0
  %486 = vmatprep.mubr.f32.mxu0 0.0
  %487 = vmatmul.mubr.f32.gmra.mxu0 %v191
  %v488 = vpop.f32.mrf.mxu0
  %v489 = vadd.f32 0.0, %v488
  %v490 = vpop.f32.mrf.mxu0
  %491 = vmatprep.mubr.f32.mxu0 0.0
  %492 = vmatmul.mubr.f32.gmra.mxu0 %v194
  %v493 = vpop.f32.mrf.mxu0
  %v494 = vadd.f32 0.0, %v493
  %v495 = vpop.f32.mrf.mxu0
  %496 = vmatprep.mubr.f32.mxu0 0.0
  %497 = vmatmul.mubr.f32.gmra.mxu0 %v197
  %v498 = vpop.f32.mrf.mxu0
  %v499 = vadd.f32 0.0, %v498
  %v500 = vpop.f32.mrf.mxu0
  %501 = vmatprep.mubr.f32.mxu0 0.0
  %502 = vmatmul.mubr.f32.gmra.mxu0 %v200
  %v503 = vpop.f32.mrf.mxu0
  %v504 = vadd.f32 0.0, %v503
  %v505 = vpop.f32.mrf.mxu0
  %506 = vmatprep.mubr.f32.mxu0 0.0
  %507 = vmatmul.mubr.f32.gmra.mxu0 %v203
  %v508 = vpop.f32.mrf.mxu0
  %v509 = vadd.f32 0.0, %v508
  %v510 = vpop.f32.mrf.mxu0
  %511 = vmatprep.mubr.f32.mxu0 0.0
  %512 = vmatmul.mubr.f32.gmra.mxu0 %v206
  %v513 = vpop.f32.mrf.mxu0
  %v514 = vadd.f32 0.0, %v513
  %v515 = vpop.f32.mrf.mxu0
  %516 = vmatprep.mubr.f32.mxu0 0.0
  %517 = vmatmul.mubr.f32.gmra.mxu0 %v209
  %v518 = vpop.f32.mrf.mxu0
  %v519 = vadd.f32 0.0, %v518
  %v520 = vpop.f32.mrf.mxu0
  %521 = vmatprep.mubr.f32.mxu0 0.0
  %522 = vmatmul.mubr.f32.gmra.mxu0 %v212
  %v523 = vpop.f32.mrf.mxu0
  %v524 = vadd.f32 0.0, %v523
  %v525 = vpop.f32.mrf.mxu0
  %526 = vmatprep.mubr.f32.mxu0 0.0
  %527 = vmatmul.mubr.f32.gmra.mxu0 %v215
  %v528 = vpop.f32.mrf.mxu0
  %v529 = vadd.f32 0.0, %v528
  %v530 = vpop.f32.mrf.mxu0
  %531 = vmatprep.mubr.f32.mxu0 0.0
  %532 = vmatmul.mubr.f32.gmra.mxu0 %v218
  %v533 = vpop.f32.mrf.mxu0
  %v534 = vadd.f32 0.0, %v533
  %v535 = vpop.f32.mrf.mxu0
  %536 = vmatprep.mubr.f32.mxu0 0.0
  %537 = vmatmul.mubr.f32.gmra.mxu0 %v221
  %v538 = vpop.f32.mrf.mxu0
  %v539 = vadd.f32 0.0, %v538
  %v540 = vpop.f32.mrf.mxu0
  %541 = vmatprep.mubr.f32.mxu0 0.0
  %542 = vmatmul.mubr.f32.gmra.mxu0 %v224
  %v543 = vpop.f32.mrf.mxu0
  %v544 = vadd.f32 0.0, %v543
  %v545 = vpop.f32.mrf.mxu0
  %546 = vmatprep.mubr.f32.mxu0 0.0
  %547 = vmatmul.mubr.f32.gmra.mxu0 %v227
  %v548 = vpop.f32.mrf.mxu0
  %v549 = vadd.f32 0.0, %v548
  %v550 = vpop.f32.mrf.mxu0
  %551 = vmatprep.mubr.f32.mxu0 0.0
  %552 = vmatmul.mubr.f32.gmra.mxu0 %v230
  %v553 = vpop.f32.mrf.mxu0
  %v554 = vadd.f32 0.0, %v553
  %v555 = vpop.f32.mrf.mxu0
  %556 = vdwg.mxu0
  %v557 = vmax.f32 %v299, %v364
  %v558 = vmax.f32 %v304, %v369
  %v559 = vmax.f32 %v309, %v374
  %v560 = vmax.f32 %v314, %v379
  %v561 = vmax.f32 %v319, %v384
  %v562 = vmax.f32 %v324, %v389
  %v563 = vmax.f32 %v329, %v394
  %v564 = vmax.f32 %v334, %v399
  %v565 = vmax.f32 %v339, %v404
  %v566 = vmax.f32 %v344, %v409
  %v567 = vmax.f32 %v349, %v414
  %v568 = vmax.f32 %v354, %v419
  %v569 = vmax.f32 %v359, %v424
  %v570 = vmax.f32 %v429, %v494
  %v571 = vmax.f32 %v434, %v499
  %v572 = vmax.f32 %v439, %v504
  %v573 = vmax.f32 %v444, %v509
  %v574 = vmax.f32 %v449, %v514
  %v575 = vmax.f32 %v454, %v519
  %v576 = vmax.f32 %v459, %v524
  %v577 = vmax.f32 %v464, %v529
  %v578 = vmax.f32 %v469, %v534
  %v579 = vmax.f32 %v474, %v539
  %v580 = vmax.f32 %v479, %v544
  %v581 = vmax.f32 %v484, %v549
  %v582 = vmax.f32 %v489, %v554
  %v583 = vmax.f32 %v557, %v570
  %v584 = vmax.f32 %v558, %v571
  %v585 = vmax.f32 %v559, %v572
  %v586 = vmax.f32 %v560, %v573
  %v587 = vmax.f32 %v561, %v574
  %v588 = vmax.f32 %v562, %v575
  %v589 = vmax.f32 %v563, %v576
  %v590 = vmax.f32 %v564, %v577
  %v591 = vmax.f32 %v565, %v578
  %v592 = vmax.f32 %v566, %v579
  %v593 = vmax.f32 %v567, %v580
  %v594 = vmax.f32 %v568, %v581
  %v595 = vmax.f32 %v569, %v582
  %v596 = vld [vmem:[%s2] sm:$0x1]
  %v598 = vlaneseq
  %v599 = vshrl.u32 %v598, 7
  %v600 = vsub.s32 0, %v599
  %v601 = vrot.slane %v596, %v600
  %v603 = vadd.f32 %v583, %v601
  %v604 = vadd.f32 %v584, %v601
  %v605 = vadd.f32 %v585, %v601
  %v606 = vadd.f32 %v586, %v601
  %v607 = vadd.f32 %v587, %v601
  %v608 = vadd.f32 %v588, %v601
  %v609 = vadd.f32 %v589, %v601
  %v610 = vadd.f32 %v590, %v601
  %v611 = vadd.f32 %v591, %v601
  %v612 = vadd.f32 %v592, %v601
  %v613 = vadd.f32 %v593, %v601
  %v614 = vadd.f32 %v594, %v601
  %v615 = vadd.f32 %v595, %v601
  %v616 = vmax.f32 %v603, 0.0
  %v617 = vmax.f32 %v604, 0.0
  %v618 = vmax.f32 %v605, 0.0
  %v619 = vmax.f32 %v606, 0.0
  %v620 = vmax.f32 %v607, 0.0
  %v621 = vmax.f32 %v608, 0.0
  %v622 = vmax.f32 %v609, 0.0
  %v623 = vmax.f32 %v610, 0.0
  %v624 = vmax.f32 %v611, 0.0
  %v625 = vmax.f32 %v612, 0.0
  %v626 = vmax.f32 %v613, 0.0
  %v627 = vmax.f32 %v614, 0.0
  %v628 = vmax.f32 %v615, 0.0
  %629 = vst [vmem:[%s3] sm:$0xff] %v616
  %630 = vst [vmem:[%s3 + $0x8] sm:$0xff] %v617
  %631 = vst [vmem:[%s3 + $0x10] sm:$0xff] %v618
  %632 = vst [vmem:[%s3 + $0x18] sm:$0xff] %v619
  %633 = vst [vmem:[%s3 + $0x20] sm:$0xff] %v620
  %634 = vst [vmem:[%s3 + $0x28] sm:$0xff] %v621
  %635 = vst [vmem:[%s3 + $0x30] sm:$0xff] %v622
  %636 = vst [vmem:[%s3 + $0x38] sm:$0xff] %v623
  %637 = vst [vmem:[%s3 + $0x40] sm:$0xff] %v624
  %638 = vst [vmem:[%s3 + $0x48] sm:$0xff] %v625
  %639 = vst [vmem:[%s3 + $0x50] sm:$0xff] %v626
  %640 = vst [vmem:[%s3 + $0x58] sm:$0xff] %v627
  %641 = vst [vmem:[%s3 + $0x60] sm:$0xff] %v628
  // Predicated region
  $region14: #{cnn_forward.4} parent=0 // pred_check
    _
  $region15: #{cnn_forward.4} parent=0 // pred_check_branch
    %643 = sbr.rel (0) target = $region17
  $region16: #{cnn_forward.4} parent=0 // pred_region
    _
  $region17: #{cnn_forward.4} parent=0 // pred_fallthru
    _
  // Predicated region
  $region18: #{cnn_forward.4} parent=0 // pred_check
    _
  $region19: #{cnn_forward.4} parent=0 // pred_check_branch
    %645 = sbr.rel (0) target = $region21
  $region20: #{cnn_forward.4} parent=0 // pred_region
    _
  $region21: #{cnn_forward.4} parent=0 // pred_fallthru
    _

// kernel: cnn_forward.5
$region0: #{cnn_forward.5}
  #allocation0 [shape = 'u32[]', space=smem, size = 0x4, offset = 0x4, fixed_abs, tag = 'smem constant byte address 0x4 - core index']
  #allocation1 [shape = 'u32[144,128]{1,0:T(1,128)}', space=vmem, size = 0x12000, scoped, tag = 'internal scratch']
  %s0 = inlined_call_operand.vmem [shape: f32[2,784], index: 0, kind: input, shape index: {}]
  %s1 = inlined_call_operand.vmem [shape: f32[784,128], index: 1, kind: input, shape index: {}]
  %s2 = inlined_call_operand.vmem [shape: f32[1,128], index: 2, kind: input, shape index: {}]
  %s3 = inlined_call_operand.hbm [shape: f32[2,128], index: 3, kind: output, shape index: {}]
  %s4 = sld [smem:[#allocation0]]
  $region22: #{cnn_forward.5} parent=0
    _
  %s6 = ssub.s32 1, %s4
  %s7 = scalar_select 0, %s6, %s4
  $region1: #{cnn_forward.5} parent=0
    #allocation2 [shape = 'u8[1024]{0}', space=vmem, size = 0x400, scoped, tag = 'output window, operand 0, single buffered']
    #allocation3 [shape = 's32[1]{0}', space=sflag, size = 0x4, scoped, tag = 'scoped memory for cnn_forward.5']
    %8 = vsyncpa [#allocation3], 0
    // Predicated region
    $region2: #{cnn_forward.5} parent=1 // pred_check
      _
    $region3: #{cnn_forward.5} parent=1 // pred_check_branch
      %10 = sbr.rel (0) target = $region5
    $region4: #{cnn_forward.5} parent=1 // pred_region
      _
    $region5: #{cnn_forward.5} parent=1 // pred_fallthru
      _
    // Predicated region
    $region6: #{cnn_forward.5} parent=1 // pred_check
      _
    $region7: #{cnn_forward.5} parent=1 // pred_check_branch
      %12 = sbr.rel (0) target = $region9
    $region8: #{cnn_forward.5} parent=1 // pred_region
      _
    $region9: #{cnn_forward.5} parent=1 // pred_fallthru
      _
    // Predicated region
    $region10: #{cnn_forward.5} parent=1 // pred_check
      _
    $region11: #{cnn_forward.5} parent=1 // pred_check_branch
      %14 = sbr.rel (0) target = $region13
    $region12: #{cnn_forward.5} parent=1 // pred_region
      _
    $region13: #{cnn_forward.5} parent=1 // pred_fallthru
      _
    %v15 = vld [vmem:[%s0] sm:$0xff]
    %v16 = vld [vmem:[%s0 + $0x8] sm:$0x3f]
    %v17 = vld [vmem:[%s1] sm:$0xff]
    %v18 = vld [vmem:[%s1 + $0x8] sm:$0xff]
    %v19 = vld [vmem:[%s1 + $0x10] sm:$0xff]
    %v20 = vld [vmem:[%s1 + $0x18] sm:$0xff]
    %v21 = vld [vmem:[%s1 + $0x20] sm:$0xff]
    %v22 = vld [vmem:[%s1 + $0x28] sm:$0xff]
    %v23 = vld [vmem:[%s1 + $0x30] sm:$0xff]
    %v24 = vld [vmem:[%s1 + $0x38] sm:$0xff]
    %v25 = vld [vmem:[%s1 + $0x40] sm:$0xff]
    %v26 = vld [vmem:[%s1 + $0x48] sm:$0xff]
    %v27 = vld [vmem:[%s1 + $0x50] sm:$0xff]
    %v28 = vld [vmem:[%s1 + $0x58] sm:$0xff]
    %v29 = vld [vmem:[%s1 + $0x60] sm:$0xff]
    %v30 = vld [vmem:[%s1 + $0x68] sm:$0xff]
    %v31 = vld [vmem:[%s1 + $0x70] sm:$0xff]
    %v32 = vld [vmem:[%s1 + $0x78] sm:$0xff]
    %v33 = vld [vmem:[%s1 + $0x80] sm:$0xff]
    %v34 = vld [vmem:[%s1 + $0x88] sm:$0xff]
    %v35 = vld [vmem:[%s1 + $0x90] sm:$0xff]
    %v36 = vld [vmem:[%s1 + $0x98] sm:$0xff]
    %v37 = vld [vmem:[%s1 + $0xa0] sm:$0xff]
    %v38 = vld [vmem:[%s1 + $0xa8] sm:$0xff]
    %v39 = vld [vmem:[%s1 + $0xb0] sm:$0xff]
    %v40 = vld [vmem:[%s1 + $0xb8] sm:$0xff]
    %v41 = vld [vmem:[%s1 + $0xc0] sm:$0xff]
    %v42 = vld [vmem:[%s1 + $0xc8] sm:$0xff]
    %v43 = vld [vmem:[%s1 + $0xd0] sm:$0xff]
    %v44 = vld [vmem:[%s1 + $0xd8] sm:$0xff]
    %v45 = vld [vmem:[%s1 + $0xe0] sm:$0xff]
    %v46 = vld [vmem:[%s1 + $0xe8] sm:$0xff]
    %v47 = vld [vmem:[%s1 + $0xf0] sm:$0xff]
    %v48 = vld [vmem:[%s1 + $0xf8] sm:$0xff]
    %v49 = vld [vmem:[%s1 + $0x100] sm:$0xff]
    %v50 = vld [vmem:[%s1 + $0x108] sm:$0xff]
    %v51 = vld [vmem:[%s1 + $0x110] sm:$0xff]
    %v52 = vld [vmem:[%s1 + $0x118] sm:$0xff]
    %v53 = vld [vmem:[%s1 + $0x120] sm:$0xff]
    %v54 = vld [vmem:[%s1 + $0x128] sm:$0xff]
    %v55 = vld [vmem:[%s1 + $0x130] sm:$0xff]
    %v56 = vld [vmem:[%s1 + $0x138] sm:$0xff]
    %v57 = vld [vmem:[%s1 + $0x140] sm:$0xff]
    %v58 = vld [vmem:[%s1 + $0x148] sm:$0xff]
    %v59 = vld [vmem:[%s1 + $0x150] sm:$0xff]
    %v60 = vld [vmem:[%s1 + $0x158] sm:$0xff]
    %v61 = vld [vmem:[%s1 + $0x160] sm:$0xff]
    %v62 = vld [vmem:[%s1 + $0x168] sm:$0xff]
    %v63 = vld [vmem:[%s1 + $0x170] sm:$0xff]
    %v64 = vld [vmem:[%s1 + $0x178] sm:$0xff]
    %v65 = vld [vmem:[%s1 + $0x180] sm:$0xff]
    %v66 = vld [vmem:[%s1 + $0x188] sm:$0xff]
    %v67 = vld [vmem:[%s1 + $0x190] sm:$0xff]
    %v68 = vld [vmem:[%s1 + $0x198] sm:$0xff]
    %v69 = vld [vmem:[%s1 + $0x1a0] sm:$0xff]
    %v70 = vld [vmem:[%s1 + $0x1a8] sm:$0xff]
    %v71 = vld [vmem:[%s1 + $0x1b0] sm:$0xff]
    %v72 = vld [vmem:[%s1 + $0x1b8] sm:$0xff]
    %v73 = vld [vmem:[%s1 + $0x1c0] sm:$0xff]
    %v74 = vld [vmem:[%s1 + $0x1c8] sm:$0xff]
    %v75 = vld [vmem:[%s1 + $0x1d0] sm:$0xff]
    %v76 = vld [vmem:[%s1 + $0x1d8] sm:$0xff]
    %v77 = vld [vmem:[%s1 + $0x1e0] sm:$0xff]
    %v78 = vld [vmem:[%s1 + $0x1e8] sm:$0xff]
    %v79 = vld [vmem:[%s1 + $0x1f0] sm:$0xff]
    %v80 = vld [vmem:[%s1 + $0x1f8] sm:$0xff]
    %v81 = vld [vmem:[%s1 + $0x200] sm:$0xff]
    %v82 = vld [vmem:[%s1 + $0x208] sm:$0xff]
    %v83 = vld [vmem:[%s1 + $0x210] sm:$0xff]
    %v84 = vld [vmem:[%s1 + $0x218] sm:$0xff]
    %v85 = vld [vmem:[%s1 + $0x220] sm:$0xff]
    %v86 = vld [vmem:[%s1 + $0x228] sm:$0xff]
    %v87 = vld [vmem:[%s1 + $0x230] sm:$0xff]
    %v88 = vld [vmem:[%s1 + $0x238] sm:$0xff]
    %v89 = vld [vmem:[%s1 + $0x240] sm:$0xff]
    %v90 = vld [vmem:[%s1 + $0x248] sm:$0xff]
    %v91 = vld [vmem:[%s1 + $0x250] sm:$0xff]
    %v92 = vld [vmem:[%s1 + $0x258] sm:$0xff]
    %v93 = vld [vmem:[%s1 + $0x260] sm:$0xff]
    %v94 = vld [vmem:[%s1 + $0x268] sm:$0xff]
    %v95 = vld [vmem:[%s1 + $0x270] sm:$0xff]
    %v96 = vld [vmem:[%s1 + $0x278] sm:$0xff]
    %v97 = vld [vmem:[%s1 + $0x280] sm:$0xff]
    %v98 = vld [vmem:[%s1 + $0x288] sm:$0xff]
    %v99 = vld [vmem:[%s1 + $0x290] sm:$0xff]
    %v100 = vld [vmem:[%s1 + $0x298] sm:$0xff]
    %v101 = vld [vmem:[%s1 + $0x2a0] sm:$0xff]
    %v102 = vld [vmem:[%s1 + $0x2a8] sm:$0xff]
    %v103 = vld [vmem:[%s1 + $0x2b0] sm:$0xff]
    %v104 = vld [vmem:[%s1 + $0x2b8] sm:$0xff]
    %v105 = vld [vmem:[%s1 + $0x2c0] sm:$0xff]
    %v106 = vld [vmem:[%s1 + $0x2c8] sm:$0xff]
    %v107 = vld [vmem:[%s1 + $0x2d0] sm:$0xff]
    %v108 = vld [vmem:[%s1 + $0x2d8] sm:$0xff]
    %v109 = vld [vmem:[%s1 + $0x2e0] sm:$0xff]
    %v110 = vld [vmem:[%s1 + $0x2e8] sm:$0xff]
    %v111 = vld [vmem:[%s1 + $0x2f0] sm:$0xff]
    %v112 = vld [vmem:[%s1 + $0x2f8] sm:$0xff]
    %v113 = vld [vmem:[%s1 + $0x300] sm:$0xff]
    %v114 = vld [vmem:[%s1 + $0x308] sm:$0xff]
    %v115 = vld [vmem:[%s2] sm:$0x1]
    %v117 = vlaneseq
    %v118 = vshrl.u32 %v117, 7
    %v119 = vsub.s32 0, %v118
    %v120 = vrot.slane %v115, %v119
    %v124 = vcombine.high %v15, %v15
    %v126 = vunpack.c.l.s4 1983009808
    %v127 = vunpack.c.0.s8 %v126
    %v128 = vlaneseq
    %v129 = vshrl.u32 %v128, 7
    %v130 = vsub.s32 %v127, %v129
    %v131 = vrot.slane %v15, %v130
    %v133 = vunpack.c.l.s4 1983009808
    %v134 = vunpack.c.0.s8 %v133
    %v135 = vlaneseq
    %v136 = vshrl.u32 %v135, 7
    %v137 = vsub.s32 %v134, %v136
    %v138 = vrot.slane %v124, %v137
    %v139 = vcombine.high %v131, %v131
    %v140 = vcombine.high %v138, %v138
    %v141 = vcombine.high %v16, %v16
    %v143 = vunpack.c.l.s4 1983009808
    %v144 = vunpack.c.0.s8 %v143
    %v145 = vlaneseq
    %v146 = vshrl.u32 %v145, 7
    %v147 = vsub.s32 %v144, %v146
    %v148 = vrot.slane %v16, %v147
    %v150 = vunpack.c.l.s4 1983009808
    %v151 = vunpack.c.0.s8 %v150
    %v152 = vlaneseq
    %v153 = vshrl.u32 %v152, 7
    %v154 = vsub.s32 %v151, %v153
    %v155 = vrot.slane %v141, %v154
    %v156 = vcombine.high %v148, %v148
    %vm163 = vcmask 130048
    %v164 = vsel %vm163, %v155, 0
    %166 = vmatprep.subr.mxu0 0.0
    %167 = vmatpush1.msra.mxu0 %v32
    %168 = vmatprep.subr.mxu0 0.0
    %169 = vmatpush1.msra.mxu0 %v31
    %170 = vmatprep.subr.mxu0 0.0
    %171 = vmatpush1.msra.mxu0 %v30
    %172 = vmatprep.subr.mxu0 0.0
    %173 = vmatpush1.msra.mxu0 %v29
    %174 = vmatprep.subr.mxu0 0.0
    %175 = vmatpush1.msra.mxu0 %v28
    %176 = vmatprep.subr.mxu0 0.0
    %177 = vmatpush1.msra.mxu0 %v27
    %178 = vmatprep.subr.mxu0 0.0
    %179 = vmatpush1.msra.mxu0 %v26
    %180 = vmatprep.subr.mxu0 0.0
    %181 = vmatpush1.msra.mxu0 %v25
    %182 = vmatprep.subr.mxu0 0.0
    %183 = vmatpush1.msra.mxu0 %v24
    %184 = vmatprep.subr.mxu0 0.0
    %185 = vmatpush1.msra.mxu0 %v23
    %186 = vmatprep.subr.mxu0 0.0
    %187 = vmatpush1.msra.mxu0 %v22
    %188 = vmatprep.subr.mxu0 0.0
    %189 = vmatpush1.msra.mxu0 %v21
    %190 = vmatprep.subr.mxu0 0.0
    %191 = vmatpush1.msra.mxu0 %v20
    %192 = vmatprep.subr.mxu0 0.0
    %193 = vmatpush1.msra.mxu0 %v19
    %194 = vmatprep.subr.mxu0 0.0
    %195 = vmatpush1.msra.mxu0 %v18
    %196 = vmatprep.subr.mxu0 0.0
    %197 = vmatpush1.msra.mxu0 %v17
    %198 = vmatprep.subr.mxu0 0.0
    %199 = vmatpush2.msra.mxu0 %v48
    %200 = vmatprep.subr.mxu0 0.0
    %201 = vmatpush2.msra.mxu0 %v47
    %202 = vmatprep.subr.mxu0 0.0
    %203 = vmatpush2.msra.mxu0 %v46
    %204 = vmatprep.subr.mxu0 0.0
    %205 = vmatpush2.msra.mxu0 %v45
    %206 = vmatprep.subr.mxu0 0.0
    %207 = vmatpush2.msra.mxu0 %v44
    %208 = vmatprep.subr.mxu0 0.0
    %209 = vmatpush2.msra.mxu0 %v43
    %210 = vmatprep.subr.mxu0 0.0
    %211 = vmatpush2.msra.mxu0 %v42
    %212 = vmatprep.subr.mxu0 0.0
    %213 = vmatpush2.msra.mxu0 %v41
    %214 = vmatprep.subr.mxu0 0.0
    %215 = vmatpush2.msra.mxu0 %v40
    %216 = vmatprep.subr.mxu0 0.0
    %217 = vmatpush2.msra.mxu0 %v39
    %218 = vmatprep.subr.mxu0 0.0
    %219 = vmatpush2.msra.mxu0 %v38
    %220 = vmatprep.subr.mxu0 0.0
    %221 = vmatpush2.msra.mxu0 %v37
    %222 = vmatprep.subr.mxu0 0.0
    %223 = vmatpush2.msra.mxu0 %v36
    %224 = vmatprep.subr.mxu0 0.0
    %225 = vmatpush2.msra.mxu0 %v35
    %226 = vmatprep.subr.mxu0 0.0
    %227 = vmatpush2.msra.mxu0 %v34
    %228 = vmatprep.subr.mxu0 0.0
    %229 = vmatpush2.msra.mxu0 %v33
    %230 = vmatprep.mubr.f32.mxu0 %v139
    %231 = vmatmul.mubr.f32.gmra.mxu0 %v131
    %v232 = vpop.f32.mrf.mxu0
    %v233 = vadd.f32 %v120, %v232
    %v234 = vpop.f32.mrf.mxu0
    %235 = vdwg.mxu0
    %236 = vmatprep.subr.mxu0 0.0
    %237 = vmatpush1.msra.mxu0 %v64
    %238 = vmatprep.subr.mxu0 0.0
    %239 = vmatpush1.msra.mxu0 %v63
    %240 = vmatprep.subr.mxu0 0.0
    %241 = vmatpush1.msra.mxu0 %v62
    %242 = vmatprep.subr.mxu0 0.0
    %243 = vmatpush1.msra.mxu0 %v61
    %244 = vmatprep.subr.mxu0 0.0
    %245 = vmatpush1.msra.mxu0 %v60
    %246 = vmatprep.subr.mxu0 0.0
    %247 = vmatpush1.msra.mxu0 %v59
    %248 = vmatprep.subr.mxu0 0.0
    %249 = vmatpush1.msra.mxu0 %v58
    %250 = vmatprep.subr.mxu0 0.0
    %251 = vmatpush1.msra.mxu0 %v57
    %252 = vmatprep.subr.mxu0 0.0
    %253 = vmatpush1.msra.mxu0 %v56
    %254 = vmatprep.subr.mxu0 0.0
    %255 = vmatpush1.msra.mxu0 %v55
    %256 = vmatprep.subr.mxu0 0.0
    %257 = vmatpush1.msra.mxu0 %v54
    %258 = vmatprep.subr.mxu0 0.0
    %259 = vmatpush1.msra.mxu0 %v53
    %260 = vmatprep.subr.mxu0 0.0
    %261 = vmatpush1.msra.mxu0 %v52
    %262 = vmatprep.subr.mxu0 0.0
    %263 = vmatpush1.msra.mxu0 %v51
    %264 = vmatprep.subr.mxu0 0.0
    %265 = vmatpush1.msra.mxu0 %v50
    %266 = vmatprep.subr.mxu0 0.0
    %267 = vmatpush1.msra.mxu0 %v49
    %268 = vmatprep.subr.mxu0 0.0
    %269 = vmatpush2.msra.mxu0 %v80
    %270 = vmatprep.subr.mxu0 0.0
    %271 = vmatpush2.msra.mxu0 %v79
    %272 = vmatprep.subr.mxu0 0.0
    %273 = vmatpush2.msra.mxu0 %v78
    %274 = vmatprep.subr.mxu0 0.0
    %275 = vmatpush2.msra.mxu0 %v77
    %276 = vmatprep.subr.mxu0 0.0
    %277 = vmatpush2.msra.mxu0 %v76
    %278 = vmatprep.subr.mxu0 0.0
    %279 = vmatpush2.msra.mxu0 %v75
    %280 = vmatprep.subr.mxu0 0.0
    %281 = vmatpush2.msra.mxu0 %v74
    %282 = vmatprep.subr.mxu0 0.0
    %283 = vmatpush2.msra.mxu0 %v73
    %284 = vmatprep.subr.mxu0 0.0
    %285 = vmatpush2.msra.mxu0 %v72
    %286 = vmatprep.subr.mxu0 0.0
    %287 = vmatpush2.msra.mxu0 %v71
    %288 = vmatprep.subr.mxu0 0.0
    %289 = vmatpush2.msra.mxu0 %v70
    %290 = vmatprep.subr.mxu0 0.0
    %291 = vmatpush2.msra.mxu0 %v69
    %292 = vmatprep.subr.mxu0 0.0
    %293 = vmatpush2.msra.mxu0 %v68
    %294 = vmatprep.subr.mxu0 0.0
    %295 = vmatpush2.msra.mxu0 %v67
    %296 = vmatprep.subr.mxu0 0.0
    %297 = vmatpush2.msra.mxu0 %v66
    %298 = vmatprep.subr.mxu0 0.0
    %299 = vmatpush2.msra.mxu0 %v65
    %300 = vmatprep.mubr.f32.mxu0 %v140
    %301 = vmatmul.mubr.f32.gmra.mxu0 %v138
    %v302 = vpop.f32.mrf.mxu0
    %v303 = vadd.f32 %v233, %v302
    %v304 = vpop.f32.mrf.mxu0
    %305 = vdwg.mxu0
    %306 = vmatprep.subr.mxu0 0.0
    %307 = vmatpush1.msra.mxu0 %v96
    %308 = vmatprep.subr.mxu0 0.0
    %309 = vmatpush1.msra.mxu0 %v95
    %310 = vmatprep.subr.mxu0 0.0
    %311 = vmatpush1.msra.mxu0 %v94
    %312 = vmatprep.subr.mxu0 0.0
    %313 = vmatpush1.msra.mxu0 %v93
    %314 = vmatprep.subr.mxu0 0.0
    %315 = vmatpush1.msra.mxu0 %v92
    %316 = vmatprep.subr.mxu0 0.0
    %317 = vmatpush1.msra.mxu0 %v91
    %318 = vmatprep.subr.mxu0 0.0
    %319 = vmatpush1.msra.mxu0 %v90
    %320 = vmatprep.subr.mxu0 0.0
    %321 = vmatpush1.msra.mxu0 %v89
    %322 = vmatprep.subr.mxu0 0.0
    %323 = vmatpush1.msra.mxu0 %v88
    %324 = vmatprep.subr.mxu0 0.0
    %325 = vmatpush1.msra.mxu0 %v87
    %326 = vmatprep.subr.mxu0 0.0
    %327 = vmatpush1.msra.mxu0 %v86
    %328 = vmatprep.subr.mxu0 0.0
    %329 = vmatpush1.msra.mxu0 %v85
    %330 = vmatprep.subr.mxu0 0.0
    %331 = vmatpush1.msra.mxu0 %v84
    %332 = vmatprep.subr.mxu0 0.0
    %333 = vmatpush1.msra.mxu0 %v83
    %334 = vmatprep.subr.mxu0 0.0
    %335 = vmatpush1.msra.mxu0 %v82
    %336 = vmatprep.subr.mxu0 0.0
    %337 = vmatpush1.msra.mxu0 %v81
    %338 = vmatprep.subr.mxu0 0.0
    %339 = vmatpush2.msra.mxu0 %v112
    %340 = vmatprep.subr.mxu0 0.0
    %341 = vmatpush2.msra.mxu0 %v111
    %342 = vmatprep.subr.mxu0 0.0
    %343 = vmatpush2.msra.mxu0 %v110
    %344 = vmatprep.subr.mxu0 0.0
    %345 = vmatpush2.msra.mxu0 %v109
    %346 = vmatprep.subr.mxu0 0.0
    %347 = vmatpush2.msra.mxu0 %v108
    %348 = vmatprep.subr.mxu0 0.0
    %349 = vmatpush2.msra.mxu0 %v107
    %350 = vmatprep.subr.mxu0 0.0
    %351 = vmatpush2.msra.mxu0 %v106
    %352 = vmatprep.subr.mxu0 0.0
    %353 = vmatpush2.msra.mxu0 %v105
    %354 = vmatprep.subr.mxu0 0.0
    %355 = vmatpush2.msra.mxu0 %v104
    %356 = vmatprep.subr.mxu0 0.0
    %357 = vmatpush2.msra.mxu0 %v103
    %358 = vmatprep.subr.mxu0 0.0
    %359 = vmatpush2.msra.mxu0 %v102
    %360 = vmatprep.subr.mxu0 0.0
    %361 = vmatpush2.msra.mxu0 %v101
    %362 = vmatprep.subr.mxu0 0.0
    %363 = vmatpush2.msra.mxu0 %v100
    %364 = vmatprep.subr.mxu0 0.0
    %365 = vmatpush2.msra.mxu0 %v99
    %366 = vmatprep.subr.mxu0 0.0
    %367 = vmatpush2.msra.mxu0 %v98
    %368 = vmatprep.subr.mxu0 0.0
    %369 = vmatpush2.msra.mxu0 %v97
    %370 = vmatprep.mubr.f32.mxu0 %v156
    %371 = vmatmul.mubr.f32.gmra.mxu0 %v148
    %v372 = vpop.f32.mrf.mxu0
    %v373 = vadd.f32 %v303, %v372
    %v374 = vpop.f32.mrf.mxu0
    %375 = vdwg.mxu0
    %376 = vmatprep.subr.mxu0 0.0
    %377 = vmatpush1.msra.mxu0 0.0
    %378 = vmatprep.subr.mxu0 0.0
    %379 = vmatpush1.msra.mxu0 0.0
    %380 = vmatprep.subr.mxu0 0.0
    %381 = vmatpush1.msra.mxu0 0.0
    %382 = vmatprep.subr.mxu0 0.0
    %383 = vmatpush1.msra.mxu0 0.0
    %384 = vmatprep.subr.mxu0 0.0
    %385 = vmatpush1.msra.mxu0 0.0
    %386 = vmatprep.subr.mxu0 0.0
    %387 = vmatpush1.msra.mxu0 0.0
    %388 = vmatprep.subr.mxu0 0.0
    %389 = vmatpush1.msra.mxu0 0.0
    %390 = vmatprep.subr.mxu0 0.0
    %391 = vmatpush1.msra.mxu0 0.0
    %392 = vmatprep.subr.mxu0 0.0
    %393 = vmatpush1.msra.mxu0 0.0
    %394 = vmatprep.subr.mxu0 0.0
    %395 = vmatpush1.msra.mxu0 0.0
    %396 = vmatprep.subr.mxu0 0.0
    %397 = vmatpush1.msra.mxu0 0.0
    %398 = vmatprep.subr.mxu0 0.0
    %399 = vmatpush1.msra.mxu0 0.0
    %400 = vmatprep.subr.mxu0 0.0
    %401 = vmatpush1.msra.mxu0 0.0
    %402 = vmatprep.subr.mxu0 0.0
    %403 = vmatpush1.msra.mxu0 0.0
    %404 = vmatprep.subr.mxu0 0.0
    %405 = vmatpush1.msra.mxu0 %v114
    %406 = vmatprep.subr.mxu0 0.0
    %407 = vmatpush1.msra.mxu0 %v113
    %408 = vmatprep.subr.mxu0 0.0
    %409 = vmatpush2.msra.mxu0 0.0
    %410 = vmatprep.subr.mxu0 0.0
    %411 = vmatpush2.msra.mxu0 0.0
    %412 = vmatprep.subr.mxu0 0.0
    %413 = vmatpush2.msra.mxu0 0.0
    %414 = vmatprep.subr.mxu0 0.0
    %415 = vmatpush2.msra.mxu0 0.0
    %416 = vmatprep.subr.mxu0 0.0
    %417 = vmatpush2.msra.mxu0 0.0
    %418 = vmatprep.subr.mxu0 0.0
    %419 = vmatpush2.msra.mxu0 0.0
    %420 = vmatprep.subr.mxu0 0.0
    %421 = vmatpush2.msra.mxu0 0.0
    %422 = vmatprep.subr.mxu0 0.0
    %423 = vmatpush2.msra.mxu0 0.0
    %424 = vmatprep.subr.mxu0 0.0
    %425 = vmatpush2.msra.mxu0 0.0
    %426 = vmatprep.subr.mxu0 0.0
    %427 = vmatpush2.msra.mxu0 0.0
    %428 = vmatprep.subr.mxu0 0.0
    %429 = vmatpush2.msra.mxu0 0.0
    %430 = vmatprep.subr.mxu0 0.0
    %431 = vmatpush2.msra.mxu0 0.0
    %432 = vmatprep.subr.mxu0 0.0
    %433 = vmatpush2.msra.mxu0 0.0
    %434 = vmatprep.subr.mxu0 0.0
    %435 = vmatpush2.msra.mxu0 0.0
    %436 = vmatprep.subr.mxu0 0.0
    %437 = vmatpush2.msra.mxu0 0.0
    %438 = vmatprep.subr.mxu0 0.0
    %439 = vmatpush2.msra.mxu0 0.0
    %440 = vmatprep.mubr.f32.mxu0 0.0
    %441 = vmatmul.mubr.f32.gmra.mxu0 %v164
    %v442 = vpop.f32.mrf.mxu0
    %v443 = vadd.f32 %v373, %v442
    %v444 = vpop.f32.mrf.mxu0
    %445 = vdwg.mxu0
    %446 = vst [vmem:[#allocation2] sm:$0x3] %v443
    // Predicated region
    $region14: #{cnn_forward.5} parent=1 // pred_check
      _
    $region15: #{cnn_forward.5} parent=1 // pred_check_branch
      %448 = sbr.rel (0) target = $region17
    $region16: #{cnn_forward.5} parent=1 // pred_region
      %s450 = ssub.s32 32, 32
      %451 = vsyncadd [#allocation3], %s450
      %s453 = sshll.u32 [#allocation2], 4
      %s454 = int_to_ptr.vmem [resolvable:$true] %s453
      %456 = dma.vmem_to_hbm [thread:$0]  %s454, 32, %s3, [#allocation3]
    $region17: #{cnn_forward.5} parent=1 // pred_fallthru
      _
    // Predicated region
    $region18: #{cnn_forward.5} parent=1 // pred_check
      _
    $region19: #{cnn_forward.5} parent=1 // pred_check_branch
      %458 = sbr.rel (0) target = $region21
    $region20: #{cnn_forward.5} parent=1 // pred_region
      %459 = dma.done [#allocation3], 32
    $region21: #{cnn_forward.5} parent=1 // pred_fallthru
      _
    %460 = vsyncpa [#allocation3], 1

</llo_original>
